<compile_context>
chip_gen: v7x
topology: tpu7x:2x2x1
jax: 0.10.0
libtpu: 0.0.40
codegen_flags: <defaults>
</compile_context>

<pallas_src>
import jax
import jax.numpy as jnp
from jax.experimental import pallas as pl
from jax.experimental.pallas import tpu as pltpu

IN_DIM = 28 * 28   # 784
H1 = 312
H1_PAD = 384       # 312 -> 384: 3 full 128-lane groups (zero-padded, exact)
H2 = 256
OUT_DIM = 10
OUT_PAD = 128      # 10 -> 128: lane-dense output store (zero-padded, exact)

MAX_BATCH_TILE = 1024   # rows per grid step for large batches (fits VMEM on all chips)


def _round_up(n, m):
    return ((n + m - 1) // m) * m


def mlp_kernel(x_ref, w1_ref, b1_ref, w2_ref, b2_ref, w3_ref, b3_ref, o_ref):
    x = x_ref[...]                                   # (TB, 784) bf16

    # Layer 1: Linear(784 -> 384pad) + ReLU. bf16 MXU inputs, f32 accumulate,
    # f32 epilogue (bias + ReLU).
    h1 = jnp.dot(x, w1_ref[...], preferred_element_type=jnp.float32) + b1_ref[...]
    h1 = jnp.maximum(h1, 0.0)

    # Layer 2: Linear(384pad -> 256) + ReLU.
    h2 = jnp.dot(h1.astype(jnp.bfloat16), w2_ref[...],
                 preferred_element_type=jnp.float32) + b2_ref[...]
    h2 = jnp.maximum(h2, 0.0)

    # Layer 3: Linear(256 -> 128pad) logits (lane-dense store; sliced to 10 outside).
    logits = jnp.dot(h2.astype(jnp.bfloat16), w3_ref[...],
                     preferred_element_type=jnp.float32) + b3_ref[...]
    o_ref[...] = logits.astype(o_ref.dtype)


@jax.jit
def neural_network_forward(x, kernel_params):
    """x: (B, 28, 28) float32. kernel_params: padded bf16 weights / f32 biases.
    Returns logits (B, 10) float32."""
    w1, b1, w2, b2, w3, b3 = kernel_params
    B = x.shape[0]
    x_flat = x.reshape(B, -1).astype(jnp.bfloat16)   # nn.Flatten + bf16 matmul input

    # Batch tiling: single tile for small/latency batches, 1024-row tiles otherwise.
    TB = min(MAX_BATCH_TILE, _round_up(B, 16))       # 16-row sublane packing for bf16
    Bp = _round_up(B, TB)
    if Bp != B:
        x_flat = jnp.pad(x_flat, ((0, Bp - B), (0, 0)))
    grid = (Bp // TB,)

    resident = lambda shape: pl.BlockSpec(shape, lambda i: (0,) * len(shape))

    out_padded = pl.pallas_call(
        mlp_kernel,
        out_shape=jax.ShapeDtypeStruct((Bp, OUT_PAD), jnp.float32),
        grid=grid,
        in_specs=[
            pl.BlockSpec((TB, IN_DIM), lambda i: (i, 0)),   # x: streamed per batch tile
            resident((IN_DIM, H1_PAD)), resident((1, H1_PAD)),
            resident((H1_PAD, H2)),     resident((1, H2)),
            resident((H2, OUT_PAD)),    resident((1, OUT_PAD)),
        ],
        out_specs=pl.BlockSpec((TB, OUT_PAD), lambda i: (i, 0)),
        compiler_params=pltpu.CompilerParams(
            dimension_semantics=("parallel",),              # v7x: split batch tiles over 2 TCs
        ),
    )(x_flat, w1, b1, w2, b2, w3, b3)

    return out_padded[:B, :OUT_DIM]


def init_params(key):
    """PyTorch nn.Linear default init (uniform +/- 1/sqrt(fan_in)), weights
    stored pre-transposed as (in, out). Unpadded, float32."""
    def linear(key, fan_in, fan_out):
        kw, kb = jax.random.split(key)
        bound = 1.0 / jnp.sqrt(float(fan_in))
        w = jax.random.uniform(kw, (fan_in, fan_out), jnp.float32, -bound, bound)
        b = jax.random.uniform(kb, (1, fan_out), jnp.float32, -bound, bound)
        return w, b

    k1, k2, k3 = jax.random.split(key, 3)
    w1, b1 = linear(k1, IN_DIM, H1)
    w2, b2 = linear(k2, H1, H2)
    w3, b3 = linear(k3, H2, OUT_DIM)
    return (w1, b1, w2, b2, w3, b3)


def prepare_kernel_params(params):
    """Zero-pad feature dims to lane-aligned sizes and cast weights to bf16.
    Zero padding is mathematically exact; biases stay f32 (f32 epilogue)."""
    w1, b1, w2, b2, w3, b3 = params
    w1p = jnp.pad(w1, ((0, 0), (0, H1_PAD - H1))).astype(jnp.bfloat16)
    b1p = jnp.pad(b1, ((0, 0), (0, H1_PAD - H1))).astype(jnp.float32)
    w2p = jnp.pad(w2, ((0, H1_PAD - H1), (0, 0))).astype(jnp.bfloat16)
    b2p = b2.astype(jnp.float32)
    w3p = jnp.pad(w3, ((0, 0), (0, OUT_PAD - OUT_DIM))).astype(jnp.bfloat16)
    b3p = jnp.pad(b3, ((0, 0), (0, OUT_PAD - OUT_DIM))).astype(jnp.float32)
    return (w1p, b1p, w2p, b2p, w3p, b3p)


def reference_forward(x, kernel_params):
    """Pure-JAX reference using the same bf16-quantized weights / bf16 matmul
    inputs with f32 accumulation, so it matches the kernel math."""
    w1, b1, w2, b2, w3, b3 = kernel_params
    f32 = lambda a: a.astype(jnp.float32)
    bfq = lambda a: a.astype(jnp.bfloat16).astype(jnp.float32)
    h = bfq(x.reshape(x.shape[0], -1))
    h = jnp.maximum(h @ f32(w1) + b1, 0.0)
    h = jnp.maximum(bfq(h) @ f32(w2) + b2, 0.0)
    logits = bfq(h) @ f32(w3) + b3
    return logits[:, :OUT_DIM]


if __name__ == "__main__":
    key = jax.random.PRNGKey(0)
    k_param, k_x = jax.random.split(key)

    params = init_params(k_param)
    kernel_params = prepare_kernel_params(params)

    x = jax.random.normal(k_x, (2, 28, 28), jnp.float32)   # batch=2, MNIST-shaped

    logits = neural_network_forward(x, kernel_params)
    logits = jax.block_until_ready(logits)

    ref = reference_forward(x, kernel_params)
    assert logits.shape == (2, OUT_DIM), logits.shape
    assert jnp.allclose(logits, ref, atol=2e-3, rtol=2e-3), "mismatch vs reference"

    print("KERNEL_OK")
</pallas_src>

<mosaic_0001>
module attributes {stable_mosaic.version = 11 : i64} {
  func.func @mlp_kernel(%arg0: i32, %arg1: memref<16x784xbf16, #tpu.memory_space<vmem>>, %arg2: memref<784x384xbf16, #tpu.memory_space<vmem>>, %arg3: memref<1x384xf32, #tpu.memory_space<vmem>>, %arg4: memref<384x256xbf16, #tpu.memory_space<vmem>>, %arg5: memref<1x256xf32, #tpu.memory_space<vmem>>, %arg6: memref<256x128xbf16, #tpu.memory_space<vmem>>, %arg7: memref<1x128xf32, #tpu.memory_space<vmem>>, %arg8: memref<16x128xf32, #tpu.memory_space<vmem>>) attributes {dimension_semantics = [#tpu.dimension_semantics<parallel>], iteration_bounds = array<i64: 1>, scalar_prefetch = 0 : i64, scratch_operands = 0 : i64, tpu.core_type = #tpu.core_type<tc>, window_params = [{transform_indices = @transform_0, window_bounds = array<i64: 16, 784>}, {pipeline_mode = #tpu.pipeline_mode<synchronous>, transform_indices = @transform_1, window_bounds = array<i64: 784, 384>}, {pipeline_mode = #tpu.pipeline_mode<synchronous>, transform_indices = @transform_2, window_bounds = array<i64: 1, 384>}, {pipeline_mode = #tpu.pipeline_mode<synchronous>, transform_indices = @transform_3, window_bounds = array<i64: 384, 256>}, {pipeline_mode = #tpu.pipeline_mode<synchronous>, transform_indices = @transform_4, window_bounds = array<i64: 1, 256>}, {pipeline_mode = #tpu.pipeline_mode<synchronous>, transform_indices = @transform_5, window_bounds = array<i64: 256, 128>}, {pipeline_mode = #tpu.pipeline_mode<synchronous>, transform_indices = @transform_6, window_bounds = array<i64: 1, 128>}, {transform_indices = @transform_7, window_bounds = array<i64: 16, 128>}]} {
    %c0 = arith.constant 0 : index
    %c0_0 = arith.constant 0 : index
    %0 = vector.load %arg1[%c0, %c0_0] : memref<16x784xbf16, #tpu.memory_space<vmem>>, vector<16x784xbf16>
    %c0_1 = arith.constant 0 : index
    %c0_2 = arith.constant 0 : index
    %1 = vector.load %arg2[%c0_1, %c0_2] : memref<784x384xbf16, #tpu.memory_space<vmem>>, vector<784x384xbf16>
    %cst = arith.constant dense<0.000000e+00> : vector<16x384xf32>
    %2 = tpu.matmul %0, %1, %cst {dimension_numbers = #tpu.dot_dimension_numbers<[1], [0], [0], [1], [0, 0, 1, 1], [], []>} : vector<16x784xbf16>, vector<784x384xbf16>, vector<16x384xf32> -> vector<16x384xf32>
    %c0_3 = arith.constant 0 : index
    %c0_4 = arith.constant 0 : index
    %3 = vector.load %arg3[%c0_3, %c0_4] : memref<1x384xf32, #tpu.memory_space<vmem>>, vector<1x384xf32>
    %4 = vector.broadcast %3 : vector<1x384xf32> to vector<16x384xf32>
    %5 = arith.addf %2, %4 : vector<16x384xf32>
    %cst_5 = arith.constant 0.000000e+00 : f32
    %6 = vector.broadcast %cst_5 : f32 to vector<16x384xf32>
    %7 = arith.maximumf %5, %6 : vector<16x384xf32>
    %8 = arith.truncf %7 : vector<16x384xf32> to vector<16x384xbf16>
    %c0_6 = arith.constant 0 : index
    %c0_7 = arith.constant 0 : index
    %9 = vector.load %arg4[%c0_6, %c0_7] : memref<384x256xbf16, #tpu.memory_space<vmem>>, vector<384x256xbf16>
    %cst_8 = arith.constant dense<0.000000e+00> : vector<16x256xf32>
    %10 = tpu.matmul %8, %9, %cst_8 {dimension_numbers = #tpu.dot_dimension_numbers<[1], [0], [0], [1], [0, 0, 1, 1], [], []>} : vector<16x384xbf16>, vector<384x256xbf16>, vector<16x256xf32> -> vector<16x256xf32>
    %c0_9 = arith.constant 0 : index
    %c0_10 = arith.constant 0 : index
    %11 = vector.load %arg5[%c0_9, %c0_10] : memref<1x256xf32, #tpu.memory_space<vmem>>, vector<1x256xf32>
    %12 = vector.broadcast %11 : vector<1x256xf32> to vector<16x256xf32>
    %13 = arith.addf %10, %12 : vector<16x256xf32>
    %cst_11 = arith.constant 0.000000e+00 : f32
    %14 = vector.broadcast %cst_11 : f32 to vector<16x256xf32>
    %15 = arith.maximumf %13, %14 : vector<16x256xf32>
    %16 = arith.truncf %15 : vector<16x256xf32> to vector<16x256xbf16>
    %c0_12 = arith.constant 0 : index
    %c0_13 = arith.constant 0 : index
    %17 = vector.load %arg6[%c0_12, %c0_13] : memref<256x128xbf16, #tpu.memory_space<vmem>>, vector<256x128xbf16>
    %cst_14 = arith.constant dense<0.000000e+00> : vector<16x128xf32>
    %18 = tpu.matmul %16, %17, %cst_14 {dimension_numbers = #tpu.dot_dimension_numbers<[1], [0], [0], [1], [0, 0, 1, 1], [], []>} : vector<16x256xbf16>, vector<256x128xbf16>, vector<16x128xf32> -> vector<16x128xf32>
    %c0_15 = arith.constant 0 : index
    %c0_16 = arith.constant 0 : index
    %19 = vector.load %arg7[%c0_15, %c0_16] : memref<1x128xf32, #tpu.memory_space<vmem>>, vector<1x128xf32>
    %20 = vector.broadcast %19 : vector<1x128xf32> to vector<16x128xf32>
    %21 = arith.addf %18, %20 : vector<16x128xf32>
    %c0_17 = arith.constant 0 : index
    %c0_18 = arith.constant 0 : index
    %22 = vector.load %arg8[%c0_17, %c0_18] : memref<16x128xf32, #tpu.memory_space<vmem>>, vector<16x128xf32>
    tpu.vector_store %arg8[%c0_17, %c0_18], %21 {strides = array<i32>} : memref<16x128xf32, #tpu.memory_space<vmem>>, vector<16x128xf32>,
    return
  }
  func.func @transform_0(%arg0: i32) -> (i32, i32) {
    %c0_i32 = arith.constant 0 : i32
    %c0_i32_0 = arith.constant 0 : i32
    return %arg0, %c0_i32 : i32, i32
  }
  func.func @transform_1(%arg0: i32) -> (i32, i32) {
    %c0_i32 = arith.constant 0 : i32
    %c0_i32_0 = arith.constant 0 : i32
    %c0_i32_1 = arith.constant 0 : i32
    return %c0_i32, %c0_i32_0 : i32, i32
  }
  func.func @transform_2(%arg0: i32) -> (i32, i32) {
    %c0_i32 = arith.constant 0 : i32
    %c0_i32_0 = arith.constant 0 : i32
    %c0_i32_1 = arith.constant 0 : i32
    return %c0_i32, %c0_i32_0 : i32, i32
  }
  func.func @transform_3(%arg0: i32) -> (i32, i32) {
    %c0_i32 = arith.constant 0 : i32
    %c0_i32_0 = arith.constant 0 : i32
    %c0_i32_1 = arith.constant 0 : i32
    return %c0_i32, %c0_i32_0 : i32, i32
  }
  func.func @transform_4(%arg0: i32) -> (i32, i32) {
    %c0_i32 = arith.constant 0 : i32
    %c0_i32_0 = arith.constant 0 : i32
    %c0_i32_1 = arith.constant 0 : i32
    return %c0_i32, %c0_i32_0 : i32, i32
  }
  func.func @transform_5(%arg0: i32) -> (i32, i32) {
    %c0_i32 = arith.constant 0 : i32
    %c0_i32_0 = arith.constant 0 : i32
    %c0_i32_1 = arith.constant 0 : i32
    return %c0_i32, %c0_i32_0 : i32, i32
  }
  func.func @transform_6(%arg0: i32) -> (i32, i32) {
    %c0_i32 = arith.constant 0 : i32
    %c0_i32_0 = arith.constant 0 : i32
    %c0_i32_1 = arith.constant 0 : i32
    return %c0_i32, %c0_i32_0 : i32, i32
  }
  func.func @transform_7(%arg0: i32) -> (i32, i32) {
    %c0_i32 = arith.constant 0 : i32
    %c0_i32_0 = arith.constant 0 : i32
    return %arg0, %c0_i32 : i32, i32
  }
}

</mosaic_0001>

<llo_original>
// kernel: neural_network_forward.1
$region0: #{neural_network_forward.1}
  #allocation0 [shape = 'u32[]', space=smem, size = 0x4, offset = 0x4, fixed_abs, tag = 'smem constant byte address 0x4 - core index']
  #allocation1 [shape = 'u32[144,128]{1,0:T(1,128)}', space=vmem, size = 0x12000, scoped, tag = 'internal scratch']
  %s0 = inlined_call_operand.vmem [shape: bf16[16,784], index: 0, kind: input, shape index: {}]
  %s1 = inlined_call_operand.hbm [shape: bf16[784,384], index: 1, kind: input, shape index: {}]
  %s2 = inlined_call_operand.vmem [shape: f32[1,384], index: 2, kind: input, shape index: {}]
  %s3 = inlined_call_operand.hbm [shape: bf16[384,256], index: 3, kind: input, shape index: {}]
  %s4 = inlined_call_operand.vmem [shape: f32[1,256], index: 4, kind: input, shape index: {}]
  %s5 = inlined_call_operand.vmem [shape: bf16[256,128], index: 5, kind: input, shape index: {}]
  %s6 = inlined_call_operand.vmem [shape: f32[1,128], index: 6, kind: input, shape index: {}]
  %s7 = inlined_call_operand.vmem [shape: f32[16,128], index: 7, kind: output, shape index: {}]
  %s8 = sld [smem:[#allocation0]]
  $region46: #{neural_network_forward.1} parent=0
    _
  %s10 = ssub.s32 1, %s8
  %s11 = scalar_select 0, %s10, %s8
  $region1: #{neural_network_forward.1} parent=0
    #allocation2 [shape = 'u8[602112]{0}', space=vmem, size = 0x93000, scoped, tag = 'input window, operand 1, single buffered']
    #allocation3 [shape = 's32[1]{0}', space=sflag, size = 0x4, scoped, tag = 'scoped memory for neural_network_forward.1']
    #allocation4 [shape = 'u8[196608]{0}', space=vmem, size = 0x30000, scoped, tag = 'input window, operand 3, single buffered']
    #allocation5 [shape = 's32[1]{0}', space=sflag, size = 0x4, scoped, tag = 'scoped memory for neural_network_forward.1']
    %12 = vsyncpa [#allocation3], 0
    %13 = vsyncpa [#allocation5], 0
    // Predicated region
    $region2: #{neural_network_forward.1} parent=1 // pred_check
      _
    $region3: #{neural_network_forward.1} parent=1 // pred_check_branch
      %15 = sbr.rel (0) target = $region5
    $region4: #{neural_network_forward.1} parent=1 // pred_region
      _
    $region5: #{neural_network_forward.1} parent=1 // pred_fallthru
      _
    // Predicated region
    $region6: #{neural_network_forward.1} parent=1 // pred_check
      _
    $region7: #{neural_network_forward.1} parent=1 // pred_check_branch
      %17 = sbr.rel (0) target = $region9
    $region8: #{neural_network_forward.1} parent=1 // pred_region
      %s19 = ssub.s32 18816, 18816
      %20 = vsyncadd [#allocation3], %s19
      %s21 = sshll.u32 [#allocation2], 4
      %s22 = int_to_ptr.vmem [resolvable:$true] %s21
      %27 = dma.hbm_to_vmem [thread:$0]  %s1, 18816, %s22, [#allocation3], 192, 192, 12
    $region9: #{neural_network_forward.1} parent=1 // pred_fallthru
      _
    // Predicated region
    $region10: #{neural_network_forward.1} parent=1 // pred_check
      _
    $region11: #{neural_network_forward.1} parent=1 // pred_check_branch
      %29 = sbr.rel (0) target = $region13
    $region12: #{neural_network_forward.1} parent=1 // pred_region
      _
    $region13: #{neural_network_forward.1} parent=1 // pred_fallthru
      _
    // Predicated region
    $region14: #{neural_network_forward.1} parent=1 // pred_check
      _
    $region15: #{neural_network_forward.1} parent=1 // pred_check_branch
      %31 = sbr.rel (0) target = $region17
    $region16: #{neural_network_forward.1} parent=1 // pred_region
      %s33 = ssub.s32 6144, 6144
      %34 = vsyncadd [#allocation5], %s33
      %s35 = sshll.u32 [#allocation4], 4
      %s36 = int_to_ptr.vmem [resolvable:$true] %s35
      %41 = dma.hbm_to_vmem [thread:$0]  %s3, 6144, %s36, [#allocation5], 128, 128, 8
    $region17: #{neural_network_forward.1} parent=1 // pred_fallthru
      _
    // Predicated region
    $region18: #{neural_network_forward.1} parent=1 // pred_check
      _
    $region19: #{neural_network_forward.1} parent=1 // pred_check_branch
      %43 = sbr.rel (0) target = $region21
    $region20: #{neural_network_forward.1} parent=1 // pred_region
      _
    $region21: #{neural_network_forward.1} parent=1 // pred_fallthru
      _
    // Predicated region
    $region22: #{neural_network_forward.1} parent=1 // pred_check
      _
    $region23: #{neural_network_forward.1} parent=1 // pred_check_branch
      %45 = sbr.rel (0) target = $region25
    $region24: #{neural_network_forward.1} parent=1 // pred_region
      _
    $region25: #{neural_network_forward.1} parent=1 // pred_fallthru
      _
    // Predicated region
    $region26: #{neural_network_forward.1} parent=1 // pred_check
      _
    $region27: #{neural_network_forward.1} parent=1 // pred_check_branch
      %47 = sbr.rel (0) target = $region29
    $region28: #{neural_network_forward.1} parent=1 // pred_region
      _
    $region29: #{neural_network_forward.1} parent=1 // pred_fallthru
      _
    // Predicated region
    $region30: #{neural_network_forward.1} parent=1 // pred_check
      _
    $region31: #{neural_network_forward.1} parent=1 // pred_check_branch
      %49 = sbr.rel (0) target = $region33
    $region32: #{neural_network_forward.1} parent=1 // pred_region
      %50 = dma.done [#allocation3], 18816
    $region33: #{neural_network_forward.1} parent=1 // pred_fallthru
      _
    // Predicated region
    $region34: #{neural_network_forward.1} parent=1 // pred_check
      _
    $region35: #{neural_network_forward.1} parent=1 // pred_check_branch
      %52 = sbr.rel (0) target = $region37
    $region36: #{neural_network_forward.1} parent=1 // pred_region
      %53 = dma.done [#allocation5], 6144
    $region37: #{neural_network_forward.1} parent=1 // pred_fallthru
      _
    %v55 = vld [vmem:[%s0] sm:$0xff]
    %v56 = vld [vmem:[%s0 + $0x8] sm:$0xff]
    %v57 = vld [vmem:[%s0 + $0x10] sm:$0xff]
    %v58 = vld [vmem:[%s0 + $0x18] sm:$0xf]
    %v59 = vld [vmem:[%s0 + $0x1c] sm:$0xff]
    %v60 = vld [vmem:[%s0 + $0x24] sm:$0xff]
    %v61 = vld [vmem:[%s0 + $0x2c] sm:$0xff]
    %v62 = vld [vmem:[%s0 + $0x34] sm:$0xf]
    %v63 = vld [vmem:[#allocation2] sm:$0xff]
    %v64 = vld [vmem:[#allocation2 + $0x8] sm:$0xf]
    %v65 = vld [vmem:[#allocation2 + $0xc] sm:$0xff]
    %v66 = vld [vmem:[#allocation2 + $0x14] sm:$0xf]
    %v67 = vld [vmem:[#allocation2 + $0x18] sm:$0xff]
    %v68 = vld [vmem:[#allocation2 + $0x20] sm:$0xf]
    %v69 = vld [vmem:[#allocation2 + $0x24] sm:$0xff]
    %v70 = vld [vmem:[#allocation2 + $0x2c] sm:$0xf]
    %v71 = vld [vmem:[#allocation2 + $0x30] sm:$0xff]
    %v72 = vld [vmem:[#allocation2 + $0x38] sm:$0xf]
    %v73 = vld [vmem:[#allocation2 + $0x3c] sm:$0xff]
    %v74 = vld [vmem:[#allocation2 + $0x44] sm:$0xf]
    %v75 = vld [vmem:[#allocation2 + $0x48] sm:$0xff]
    %v76 = vld [vmem:[#allocation2 + $0x50] sm:$0xf]
    %v77 = vld [vmem:[#allocation2 + $0x54] sm:$0xff]
    %v78 = vld [vmem:[#allocation2 + $0x5c] sm:$0xf]
    %v79 = vld [vmem:[#allocation2 + $0x60] sm:$0xff]
    %v80 = vld [vmem:[#allocation2 + $0x68] sm:$0xf]
    %v81 = vld [vmem:[#allocation2 + $0x6c] sm:$0xff]
    %v82 = vld [vmem:[#allocation2 + $0x74] sm:$0xf]
    %v83 = vld [vmem:[#allocation2 + $0x78] sm:$0xff]
    %v84 = vld [vmem:[#allocation2 + $0x80] sm:$0xf]
    %v85 = vld [vmem:[#allocation2 + $0x84] sm:$0xff]
    %v86 = vld [vmem:[#allocation2 + $0x8c] sm:$0xf]
    %v87 = vld [vmem:[#allocation2 + $0x90] sm:$0xff]
    %v88 = vld [vmem:[#allocation2 + $0x98] sm:$0xf]
    %v89 = vld [vmem:[#allocation2 + $0x9c] sm:$0xff]
    %v90 = vld [vmem:[#allocation2 + $0xa4] sm:$0xf]
    %v91 = vld [vmem:[#allocation2 + $0xa8] sm:$0xff]
    %v92 = vld [vmem:[#allocation2 + $0xb0] sm:$0xf]
    %v93 = vld [vmem:[#allocation2 + $0xb4] sm:$0xff]
    %v94 = vld [vmem:[#allocation2 + $0xbc] sm:$0xf]
    %v95 = vld [vmem:[#allocation2 + $0xc0] sm:$0xff]
    %v96 = vld [vmem:[#allocation2 + $0xc8] sm:$0xf]
    %v97 = vld [vmem:[#allocation2 + $0xcc] sm:$0xff]
    %v98 = vld [vmem:[#allocation2 + $0xd4] sm:$0xf]
    %v99 = vld [vmem:[#allocation2 + $0xd8] sm:$0xff]
    %v100 = vld [vmem:[#allocation2 + $0xe0] sm:$0xf]
    %v101 = vld [vmem:[#allocation2 + $0xe4] sm:$0xff]
    %v102 = vld [vmem:[#allocation2 + $0xec] sm:$0xf]
    %v103 = vld [vmem:[#allocation2 + $0xf0] sm:$0xff]
    %v104 = vld [vmem:[#allocation2 + $0xf8] sm:$0xf]
    %v105 = vld [vmem:[#allocation2 + $0xfc] sm:$0xff]
    %v106 = vld [vmem:[#allocation2 + $0x104] sm:$0xf]
    %v107 = vld [vmem:[#allocation2 + $0x108] sm:$0xff]
    %v108 = vld [vmem:[#allocation2 + $0x110] sm:$0xf]
    %v109 = vld [vmem:[#allocation2 + $0x114] sm:$0xff]
    %v110 = vld [vmem:[#allocation2 + $0x11c] sm:$0xf]
    %v111 = vld [vmem:[#allocation2 + $0x120] sm:$0xff]
    %v112 = vld [vmem:[#allocation2 + $0x128] sm:$0xf]
    %v113 = vld [vmem:[#allocation2 + $0x12c] sm:$0xff]
    %v114 = vld [vmem:[#allocation2 + $0x134] sm:$0xf]
    %v115 = vld [vmem:[#allocation2 + $0x138] sm:$0xff]
    %v116 = vld [vmem:[#allocation2 + $0x140] sm:$0xf]
    %v117 = vld [vmem:[#allocation2 + $0x144] sm:$0xff]
    %v118 = vld [vmem:[#allocation2 + $0x14c] sm:$0xf]
    %v119 = vld [vmem:[#allocation2 + $0x150] sm:$0xff]
    %v120 = vld [vmem:[#allocation2 + $0x158] sm:$0xf]
    %v121 = vld [vmem:[#allocation2 + $0x15c] sm:$0xff]
    %v122 = vld [vmem:[#allocation2 + $0x164] sm:$0xf]
    %v123 = vld [vmem:[#allocation2 + $0x168] sm:$0xff]
    %v124 = vld [vmem:[#allocation2 + $0x170] sm:$0xf]
    %v125 = vld [vmem:[#allocation2 + $0x174] sm:$0xff]
    %v126 = vld [vmem:[#allocation2 + $0x17c] sm:$0xf]
    %v127 = vld [vmem:[#allocation2 + $0x180] sm:$0xff]
    %v128 = vld [vmem:[#allocation2 + $0x188] sm:$0xf]
    %v129 = vld [vmem:[#allocation2 + $0x18c] sm:$0xff]
    %v130 = vld [vmem:[#allocation2 + $0x194] sm:$0xf]
    %v131 = vld [vmem:[#allocation2 + $0x198] sm:$0xff]
    %v132 = vld [vmem:[#allocation2 + $0x1a0] sm:$0xf]
    %v133 = vld [vmem:[#allocation2 + $0x1a4] sm:$0xff]
    %v134 = vld [vmem:[#allocation2 + $0x1ac] sm:$0xf]
    %v135 = vld [vmem:[#allocation2 + $0x1b0] sm:$0xff]
    %v136 = vld [vmem:[#allocation2 + $0x1b8] sm:$0xf]
    %v137 = vld [vmem:[#allocation2 + $0x1bc] sm:$0xff]
    %v138 = vld [vmem:[#allocation2 + $0x1c4] sm:$0xf]
    %v139 = vld [vmem:[#allocation2 + $0x1c8] sm:$0xff]
    %v140 = vld [vmem:[#allocation2 + $0x1d0] sm:$0xf]
    %v141 = vld [vmem:[#allocation2 + $0x1d4] sm:$0xff]
    %v142 = vld [vmem:[#allocation2 + $0x1dc] sm:$0xf]
    %v143 = vld [vmem:[#allocation2 + $0x1e0] sm:$0xff]
    %v144 = vld [vmem:[#allocation2 + $0x1e8] sm:$0xf]
    %v145 = vld [vmem:[#allocation2 + $0x1ec] sm:$0xff]
    %v146 = vld [vmem:[#allocation2 + $0x1f4] sm:$0xf]
    %v147 = vld [vmem:[#allocation2 + $0x1f8] sm:$0xff]
    %v148 = vld [vmem:[#allocation2 + $0x200] sm:$0xf]
    %v149 = vld [vmem:[#allocation2 + $0x204] sm:$0xff]
    %v150 = vld [vmem:[#allocation2 + $0x20c] sm:$0xf]
    %v151 = vld [vmem:[#allocation2 + $0x210] sm:$0xff]
    %v152 = vld [vmem:[#allocation2 + $0x218] sm:$0xf]
    %v153 = vld [vmem:[#allocation2 + $0x21c] sm:$0xff]
    %v154 = vld [vmem:[#allocation2 + $0x224] sm:$0xf]
    %v155 = vld [vmem:[#allocation2 + $0x228] sm:$0xff]
    %v156 = vld [vmem:[#allocation2 + $0x230] sm:$0xf]
    %v157 = vld [vmem:[#allocation2 + $0x234] sm:$0xff]
    %v158 = vld [vmem:[#allocation2 + $0x23c] sm:$0xf]
    %v159 = vld [vmem:[#allocation2 + $0x240] sm:$0xff]
    %v160 = vld [vmem:[#allocation2 + $0x248] sm:$0xf]
    %v161 = vld [vmem:[#allocation2 + $0x24c] sm:$0xff]
    %v162 = vld [vmem:[#allocation2 + $0x254] sm:$0xf]
    %v163 = vld [vmem:[#allocation2 + $0x258] sm:$0xff]
    %v164 = vld [vmem:[#allocation2 + $0x260] sm:$0xf]
    %v165 = vld [vmem:[#allocation2 + $0x264] sm:$0xff]
    %v166 = vld [vmem:[#allocation2 + $0x26c] sm:$0xf]
    %v167 = vld [vmem:[#allocation2 + $0x270] sm:$0xff]
    %v168 = vld [vmem:[#allocation2 + $0x278] sm:$0xf]
    %v169 = vld [vmem:[#allocation2 + $0x27c] sm:$0xff]
    %v170 = vld [vmem:[#allocation2 + $0x284] sm:$0xf]
    %v171 = vld [vmem:[#allocation2 + $0x288] sm:$0xff]
    %v172 = vld [vmem:[#allocation2 + $0x290] sm:$0xf]
    %v173 = vld [vmem:[#allocation2 + $0x294] sm:$0xff]
    %v174 = vld [vmem:[#allocation2 + $0x29c] sm:$0xf]
    %v175 = vld [vmem:[#allocation2 + $0x2a0] sm:$0xff]
    %v176 = vld [vmem:[#allocation2 + $0x2a8] sm:$0xf]
    %v177 = vld [vmem:[#allocation2 + $0x2ac] sm:$0xff]
    %v178 = vld [vmem:[#allocation2 + $0x2b4] sm:$0xf]
    %v179 = vld [vmem:[#allocation2 + $0x2b8] sm:$0xff]
    %v180 = vld [vmem:[#allocation2 + $0x2c0] sm:$0xf]
    %v181 = vld [vmem:[#allocation2 + $0x2c4] sm:$0xff]
    %v182 = vld [vmem:[#allocation2 + $0x2cc] sm:$0xf]
    %v183 = vld [vmem:[#allocation2 + $0x2d0] sm:$0xff]
    %v184 = vld [vmem:[#allocation2 + $0x2d8] sm:$0xf]
    %v185 = vld [vmem:[#allocation2 + $0x2dc] sm:$0xff]
    %v186 = vld [vmem:[#allocation2 + $0x2e4] sm:$0xf]
    %v187 = vld [vmem:[#allocation2 + $0x2e8] sm:$0xff]
    %v188 = vld [vmem:[#allocation2 + $0x2f0] sm:$0xf]
    %v189 = vld [vmem:[#allocation2 + $0x2f4] sm:$0xff]
    %v190 = vld [vmem:[#allocation2 + $0x2fc] sm:$0xf]
    %v191 = vld [vmem:[#allocation2 + $0x300] sm:$0xff]
    %v192 = vld [vmem:[#allocation2 + $0x308] sm:$0xf]
    %v193 = vld [vmem:[#allocation2 + $0x30c] sm:$0xff]
    %v194 = vld [vmem:[#allocation2 + $0x314] sm:$0xf]
    %v195 = vld [vmem:[#allocation2 + $0x318] sm:$0xff]
    %v196 = vld [vmem:[#allocation2 + $0x320] sm:$0xf]
    %v197 = vld [vmem:[#allocation2 + $0x324] sm:$0xff]
    %v198 = vld [vmem:[#allocation2 + $0x32c] sm:$0xf]
    %v199 = vld [vmem:[#allocation2 + $0x330] sm:$0xff]
    %v200 = vld [vmem:[#allocation2 + $0x338] sm:$0xf]
    %v201 = vld [vmem:[#allocation2 + $0x33c] sm:$0xff]
    %v202 = vld [vmem:[#allocation2 + $0x344] sm:$0xf]
    %v203 = vld [vmem:[#allocation2 + $0x348] sm:$0xff]
    %v204 = vld [vmem:[#allocation2 + $0x350] sm:$0xf]
    %v205 = vld [vmem:[#allocation2 + $0x354] sm:$0xff]
    %v206 = vld [vmem:[#allocation2 + $0x35c] sm:$0xf]
    %v207 = vld [vmem:[#allocation2 + $0x360] sm:$0xff]
    %v208 = vld [vmem:[#allocation2 + $0x368] sm:$0xf]
    %v209 = vld [vmem:[#allocation2 + $0x36c] sm:$0xff]
    %v210 = vld [vmem:[#allocation2 + $0x374] sm:$0xf]
    %v211 = vld [vmem:[#allocation2 + $0x378] sm:$0xff]
    %v212 = vld [vmem:[#allocation2 + $0x380] sm:$0xf]
    %v213 = vld [vmem:[#allocation2 + $0x384] sm:$0xff]
    %v214 = vld [vmem:[#allocation2 + $0x38c] sm:$0xf]
    %v215 = vld [vmem:[#allocation2 + $0x390] sm:$0xff]
    %v216 = vld [vmem:[#allocation2 + $0x398] sm:$0xf]
    %v217 = vld [vmem:[#allocation2 + $0x39c] sm:$0xff]
    %v218 = vld [vmem:[#allocation2 + $0x3a4] sm:$0xf]
    %v219 = vld [vmem:[#allocation2 + $0x3a8] sm:$0xff]
    %v220 = vld [vmem:[#allocation2 + $0x3b0] sm:$0xf]
    %v221 = vld [vmem:[#allocation2 + $0x3b4] sm:$0xff]
    %v222 = vld [vmem:[#allocation2 + $0x3bc] sm:$0xf]
    %v223 = vld [vmem:[#allocation2 + $0x3c0] sm:$0xff]
    %v224 = vld [vmem:[#allocation2 + $0x3c8] sm:$0xf]
    %v225 = vld [vmem:[#allocation2 + $0x3cc] sm:$0xff]
    %v226 = vld [vmem:[#allocation2 + $0x3d4] sm:$0xf]
    %v227 = vld [vmem:[#allocation2 + $0x3d8] sm:$0xff]
    %v228 = vld [vmem:[#allocation2 + $0x3e0] sm:$0xf]
    %v229 = vld [vmem:[#allocation2 + $0x3e4] sm:$0xff]
    %v230 = vld [vmem:[#allocation2 + $0x3ec] sm:$0xf]
    %v231 = vld [vmem:[#allocation2 + $0x3f0] sm:$0xff]
    %v232 = vld [vmem:[#allocation2 + $0x3f8] sm:$0xf]
    %v233 = vld [vmem:[#allocation2 + $0x3fc] sm:$0xff]
    %v234 = vld [vmem:[#allocation2 + $0x404] sm:$0xf]
    %v235 = vld [vmem:[#allocation2 + $0x408] sm:$0xff]
    %v236 = vld [vmem:[#allocation2 + $0x410] sm:$0xf]
    %v237 = vld [vmem:[#allocation2 + $0x414] sm:$0xff]
    %v238 = vld [vmem:[#allocation2 + $0x41c] sm:$0xf]
    %v239 = vld [vmem:[#allocation2 + $0x420] sm:$0xff]
    %v240 = vld [vmem:[#allocation2 + $0x428] sm:$0xf]
    %v241 = vld [vmem:[#allocation2 + $0x42c] sm:$0xff]
    %v242 = vld [vmem:[#allocation2 + $0x434] sm:$0xf]
    %v243 = vld [vmem:[#allocation2 + $0x438] sm:$0xff]
    %v244 = vld [vmem:[#allocation2 + $0x440] sm:$0xf]
    %v245 = vld [vmem:[#allocation2 + $0x444] sm:$0xff]
    %v246 = vld [vmem:[#allocation2 + $0x44c] sm:$0xf]
    %v247 = vld [vmem:[#allocation2 + $0x450] sm:$0xff]
    %v248 = vld [vmem:[#allocation2 + $0x458] sm:$0xf]
    %v249 = vld [vmem:[#allocation2 + $0x45c] sm:$0xff]
    %v250 = vld [vmem:[#allocation2 + $0x464] sm:$0xf]
    %v251 = vld [vmem:[#allocation2 + $0x468] sm:$0xff]
    %v252 = vld [vmem:[#allocation2 + $0x470] sm:$0xf]
    %v253 = vld [vmem:[#allocation2 + $0x474] sm:$0xff]
    %v254 = vld [vmem:[#allocation2 + $0x47c] sm:$0xf]
    %v255 = vld [vmem:[#allocation2 + $0x480] sm:$0xff]
    %v256 = vld [vmem:[#allocation2 + $0x488] sm:$0xf]
    %v257 = vld [vmem:[#allocation2 + $0x48c] sm:$0xff]
    %v258 = vld [vmem:[#allocation2 + $0x494] sm:$0xf]
    %v259 = vld [vmem:[%s2] sm:$0x7]
    %v261 = vlaneseq
    %v262 = vshrl.u32 %v261, 7
    %v263 = vsub.s32 0, %v262
    %v264 = vrot.slane %v259, %v263
    %v265 = vlaneseq
    %v266 = vshrl.u32 %v265, 7
    %v267 = vsub.s32 1, %v266
    %v268 = vrot.slane %v259, %v267
    %v269 = vlaneseq
    %v270 = vshrl.u32 %v269, 7
    %v271 = vsub.s32 2, %v270
    %v272 = vrot.slane %v259, %v271
    %v284 = vunpack.c.l.b16 %v55
    %v285 = vunpack.c.h.b16 %v55
    %v286 = vunpack.c.l.b16 %v56
    %v287 = vunpack.c.h.b16 %v56
    %v288 = vunpack.c.l.b16 %v57
    %v289 = vunpack.c.h.b16 %v57
    %v290 = vunpack.c.l.b16 %v58
    %v291 = vunpack.c.l.b16 %v59
    %v292 = vunpack.c.h.b16 %v59
    %v293 = vunpack.c.l.b16 %v60
    %v294 = vunpack.c.h.b16 %v60
    %v295 = vunpack.c.l.b16 %v61
    %v296 = vunpack.c.h.b16 %v61
    %v297 = vunpack.c.l.b16 %v62
    %v298 = vpack.c.b16 %v291, %v284
    %v299 = vpack.c.b16 %v292, %v285
    %v300 = vpack.c.b16 %v293, %v286
    %v301 = vpack.c.b16 %v294, %v287
    %v302 = vpack.c.b16 %v295, %v288
    %v303 = vpack.c.b16 %v296, %v289
    %v304 = vpack.c.b16 %v297, %v290
    %v507 = vunpack.c.l.b16 %v63
    %v508 = vunpack.c.h.b16 %v63
    %v509 = vunpack.c.l.b16 %v64
    %v510 = vunpack.c.l.b16 %v65
    %v511 = vunpack.c.h.b16 %v65
    %v512 = vunpack.c.l.b16 %v66
    %v513 = vunpack.c.l.b16 %v67
    %v514 = vunpack.c.h.b16 %v67
    %v515 = vunpack.c.l.b16 %v68
    %v516 = vunpack.c.l.b16 %v69
    %v517 = vunpack.c.h.b16 %v69
    %v518 = vunpack.c.l.b16 %v70
    %v519 = vunpack.c.l.b16 %v71
    %v520 = vunpack.c.h.b16 %v71
    %v521 = vunpack.c.l.b16 %v72
    %v522 = vunpack.c.l.b16 %v73
    %v523 = vunpack.c.h.b16 %v73
    %v524 = vunpack.c.l.b16 %v74
    %v525 = vunpack.c.l.b16 %v75
    %v526 = vunpack.c.h.b16 %v75
    %v527 = vunpack.c.l.b16 %v76
    %v528 = vunpack.c.l.b16 %v77
    %v529 = vunpack.c.h.b16 %v77
    %v530 = vunpack.c.l.b16 %v78
    %v531 = vunpack.c.l.b16 %v79
    %v532 = vunpack.c.h.b16 %v79
    %v533 = vunpack.c.l.b16 %v80
    %v534 = vunpack.c.l.b16 %v81
    %v535 = vunpack.c.h.b16 %v81
    %v536 = vunpack.c.l.b16 %v82
    %v537 = vunpack.c.l.b16 %v83
    %v538 = vunpack.c.h.b16 %v83
    %v539 = vunpack.c.l.b16 %v84
    %v540 = vunpack.c.l.b16 %v85
    %v541 = vunpack.c.h.b16 %v85
    %v542 = vunpack.c.l.b16 %v86
    %v543 = vunpack.c.l.b16 %v87
    %v544 = vunpack.c.h.b16 %v87
    %v545 = vunpack.c.l.b16 %v88
    %v546 = vunpack.c.l.b16 %v89
    %v547 = vunpack.c.h.b16 %v89
    %v548 = vunpack.c.l.b16 %v90
    %v549 = vunpack.c.l.b16 %v91
    %v550 = vunpack.c.h.b16 %v91
    %v551 = vunpack.c.l.b16 %v92
    %v552 = vunpack.c.l.b16 %v93
    %v553 = vunpack.c.h.b16 %v93
    %v554 = vunpack.c.l.b16 %v94
    %v555 = vunpack.c.l.b16 %v95
    %v556 = vunpack.c.h.b16 %v95
    %v557 = vunpack.c.l.b16 %v96
    %v558 = vunpack.c.l.b16 %v97
    %v559 = vunpack.c.h.b16 %v97
    %v560 = vunpack.c.l.b16 %v98
    %v561 = vunpack.c.l.b16 %v99
    %v562 = vunpack.c.h.b16 %v99
    %v563 = vunpack.c.l.b16 %v100
    %v564 = vunpack.c.l.b16 %v101
    %v565 = vunpack.c.h.b16 %v101
    %v566 = vunpack.c.l.b16 %v102
    %v567 = vunpack.c.l.b16 %v103
    %v568 = vunpack.c.h.b16 %v103
    %v569 = vunpack.c.l.b16 %v104
    %v570 = vunpack.c.l.b16 %v105
    %v571 = vunpack.c.h.b16 %v105
    %v572 = vunpack.c.l.b16 %v106
    %v573 = vunpack.c.l.b16 %v107
    %v574 = vunpack.c.h.b16 %v107
    %v575 = vunpack.c.l.b16 %v108
    %v576 = vunpack.c.l.b16 %v109
    %v577 = vunpack.c.h.b16 %v109
    %v578 = vunpack.c.l.b16 %v110
    %v579 = vunpack.c.l.b16 %v111
    %v580 = vunpack.c.h.b16 %v111
    %v581 = vunpack.c.l.b16 %v112
    %v582 = vunpack.c.l.b16 %v113
    %v583 = vunpack.c.h.b16 %v113
    %v584 = vunpack.c.l.b16 %v114
    %v585 = vunpack.c.l.b16 %v115
    %v586 = vunpack.c.h.b16 %v115
    %v587 = vunpack.c.l.b16 %v116
    %v588 = vunpack.c.l.b16 %v117
    %v589 = vunpack.c.h.b16 %v117
    %v590 = vunpack.c.l.b16 %v118
    %v591 = vunpack.c.l.b16 %v119
    %v592 = vunpack.c.h.b16 %v119
    %v593 = vunpack.c.l.b16 %v120
    %v594 = vunpack.c.l.b16 %v121
    %v595 = vunpack.c.h.b16 %v121
    %v596 = vunpack.c.l.b16 %v122
    %v597 = vunpack.c.l.b16 %v123
    %v598 = vunpack.c.h.b16 %v123
    %v599 = vunpack.c.l.b16 %v124
    %v600 = vunpack.c.l.b16 %v125
    %v601 = vunpack.c.h.b16 %v125
    %v602 = vunpack.c.l.b16 %v126
    %v603 = vunpack.c.l.b16 %v127
    %v604 = vunpack.c.h.b16 %v127
    %v605 = vunpack.c.l.b16 %v128
    %v606 = vunpack.c.l.b16 %v129
    %v607 = vunpack.c.h.b16 %v129
    %v608 = vunpack.c.l.b16 %v130
    %v609 = vunpack.c.l.b16 %v131
    %v610 = vunpack.c.h.b16 %v131
    %v611 = vunpack.c.l.b16 %v132
    %v612 = vunpack.c.l.b16 %v133
    %v613 = vunpack.c.h.b16 %v133
    %v614 = vunpack.c.l.b16 %v134
    %v615 = vunpack.c.l.b16 %v135
    %v616 = vunpack.c.h.b16 %v135
    %v617 = vunpack.c.l.b16 %v136
    %v618 = vunpack.c.l.b16 %v137
    %v619 = vunpack.c.h.b16 %v137
    %v620 = vunpack.c.l.b16 %v138
    %v621 = vunpack.c.l.b16 %v139
    %v622 = vunpack.c.h.b16 %v139
    %v623 = vunpack.c.l.b16 %v140
    %v624 = vunpack.c.l.b16 %v141
    %v625 = vunpack.c.h.b16 %v141
    %v626 = vunpack.c.l.b16 %v142
    %v627 = vunpack.c.l.b16 %v143
    %v628 = vunpack.c.h.b16 %v143
    %v629 = vunpack.c.l.b16 %v144
    %v630 = vunpack.c.l.b16 %v145
    %v631 = vunpack.c.h.b16 %v145
    %v632 = vunpack.c.l.b16 %v146
    %v633 = vunpack.c.l.b16 %v147
    %v634 = vunpack.c.h.b16 %v147
    %v635 = vunpack.c.l.b16 %v148
    %v636 = vunpack.c.l.b16 %v149
    %v637 = vunpack.c.h.b16 %v149
    %v638 = vunpack.c.l.b16 %v150
    %v639 = vunpack.c.l.b16 %v151
    %v640 = vunpack.c.h.b16 %v151
    %v641 = vunpack.c.l.b16 %v152
    %v642 = vunpack.c.l.b16 %v153
    %v643 = vunpack.c.h.b16 %v153
    %v644 = vunpack.c.l.b16 %v154
    %v645 = vunpack.c.l.b16 %v155
    %v646 = vunpack.c.h.b16 %v155
    %v647 = vunpack.c.l.b16 %v156
    %v648 = vunpack.c.l.b16 %v157
    %v649 = vunpack.c.h.b16 %v157
    %v650 = vunpack.c.l.b16 %v158
    %v651 = vunpack.c.l.b16 %v159
    %v652 = vunpack.c.h.b16 %v159
    %v653 = vunpack.c.l.b16 %v160
    %v654 = vunpack.c.l.b16 %v161
    %v655 = vunpack.c.h.b16 %v161
    %v656 = vunpack.c.l.b16 %v162
    %v657 = vunpack.c.l.b16 %v163
    %v658 = vunpack.c.h.b16 %v163
    %v659 = vunpack.c.l.b16 %v164
    %v660 = vunpack.c.l.b16 %v165
    %v661 = vunpack.c.h.b16 %v165
    %v662 = vunpack.c.l.b16 %v166
    %v663 = vunpack.c.l.b16 %v167
    %v664 = vunpack.c.h.b16 %v167
    %v665 = vunpack.c.l.b16 %v168
    %v666 = vunpack.c.l.b16 %v169
    %v667 = vunpack.c.h.b16 %v169
    %v668 = vunpack.c.l.b16 %v170
    %v669 = vunpack.c.l.b16 %v171
    %v670 = vunpack.c.h.b16 %v171
    %v671 = vunpack.c.l.b16 %v172
    %v672 = vunpack.c.l.b16 %v173
    %v673 = vunpack.c.h.b16 %v173
    %v674 = vunpack.c.l.b16 %v174
    %v675 = vunpack.c.l.b16 %v175
    %v676 = vunpack.c.h.b16 %v175
    %v677 = vunpack.c.l.b16 %v176
    %v678 = vunpack.c.l.b16 %v177
    %v679 = vunpack.c.h.b16 %v177
    %v680 = vunpack.c.l.b16 %v178
    %v681 = vunpack.c.l.b16 %v179
    %v682 = vunpack.c.h.b16 %v179
    %v683 = vunpack.c.l.b16 %v180
    %v684 = vunpack.c.l.b16 %v181
    %v685 = vunpack.c.h.b16 %v181
    %v686 = vunpack.c.l.b16 %v182
    %v687 = vunpack.c.l.b16 %v183
    %v688 = vunpack.c.h.b16 %v183
    %v689 = vunpack.c.l.b16 %v184
    %v690 = vunpack.c.l.b16 %v185
    %v691 = vunpack.c.h.b16 %v185
    %v692 = vunpack.c.l.b16 %v186
    %v693 = vunpack.c.l.b16 %v187
    %v694 = vunpack.c.h.b16 %v187
    %v695 = vunpack.c.l.b16 %v188
    %v696 = vunpack.c.l.b16 %v189
    %v697 = vunpack.c.h.b16 %v189
    %v698 = vunpack.c.l.b16 %v190
    %v699 = vunpack.c.l.b16 %v191
    %v700 = vunpack.c.h.b16 %v191
    %v701 = vunpack.c.l.b16 %v192
    %v702 = vunpack.c.l.b16 %v193
    %v703 = vunpack.c.h.b16 %v193
    %v704 = vunpack.c.l.b16 %v194
    %v705 = vunpack.c.l.b16 %v195
    %v706 = vunpack.c.h.b16 %v195
    %v707 = vunpack.c.l.b16 %v196
    %v708 = vunpack.c.l.b16 %v197
    %v709 = vunpack.c.h.b16 %v197
    %v710 = vunpack.c.l.b16 %v198
    %v711 = vunpack.c.l.b16 %v199
    %v712 = vunpack.c.h.b16 %v199
    %v713 = vunpack.c.l.b16 %v200
    %v714 = vunpack.c.l.b16 %v201
    %v715 = vunpack.c.h.b16 %v201
    %v716 = vunpack.c.l.b16 %v202
    %v717 = vunpack.c.l.b16 %v203
    %v718 = vunpack.c.h.b16 %v203
    %v719 = vunpack.c.l.b16 %v204
    %v720 = vunpack.c.l.b16 %v205
    %v721 = vunpack.c.h.b16 %v205
    %v722 = vunpack.c.l.b16 %v206
    %v723 = vunpack.c.l.b16 %v207
    %v724 = vunpack.c.h.b16 %v207
    %v725 = vunpack.c.l.b16 %v208
    %v726 = vunpack.c.l.b16 %v209
    %v727 = vunpack.c.h.b16 %v209
    %v728 = vunpack.c.l.b16 %v210
    %v729 = vunpack.c.l.b16 %v211
    %v730 = vunpack.c.h.b16 %v211
    %v731 = vunpack.c.l.b16 %v212
    %v732 = vunpack.c.l.b16 %v213
    %v733 = vunpack.c.h.b16 %v213
    %v734 = vunpack.c.l.b16 %v214
    %v735 = vunpack.c.l.b16 %v215
    %v736 = vunpack.c.h.b16 %v215
    %v737 = vunpack.c.l.b16 %v216
    %v738 = vunpack.c.l.b16 %v217
    %v739 = vunpack.c.h.b16 %v217
    %v740 = vunpack.c.l.b16 %v218
    %v741 = vunpack.c.l.b16 %v219
    %v742 = vunpack.c.h.b16 %v219
    %v743 = vunpack.c.l.b16 %v220
    %v744 = vunpack.c.l.b16 %v221
    %v745 = vunpack.c.h.b16 %v221
    %v746 = vunpack.c.l.b16 %v222
    %v747 = vunpack.c.l.b16 %v223
    %v748 = vunpack.c.h.b16 %v223
    %v749 = vunpack.c.l.b16 %v224
    %v750 = vunpack.c.l.b16 %v225
    %v751 = vunpack.c.h.b16 %v225
    %v752 = vunpack.c.l.b16 %v226
    %v753 = vunpack.c.l.b16 %v227
    %v754 = vunpack.c.h.b16 %v227
    %v755 = vunpack.c.l.b16 %v228
    %v756 = vunpack.c.l.b16 %v229
    %v757 = vunpack.c.h.b16 %v229
    %v758 = vunpack.c.l.b16 %v230
    %v759 = vunpack.c.l.b16 %v231
    %v760 = vunpack.c.h.b16 %v231
    %v761 = vunpack.c.l.b16 %v232
    %v762 = vunpack.c.l.b16 %v233
    %v763 = vunpack.c.h.b16 %v233
    %v764 = vunpack.c.l.b16 %v234
    %v765 = vunpack.c.l.b16 %v235
    %v766 = vunpack.c.h.b16 %v235
    %v767 = vunpack.c.l.b16 %v236
    %v768 = vunpack.c.l.b16 %v237
    %v769 = vunpack.c.h.b16 %v237
    %v770 = vunpack.c.l.b16 %v238
    %v771 = vunpack.c.l.b16 %v239
    %v772 = vunpack.c.h.b16 %v239
    %v773 = vunpack.c.l.b16 %v240
    %v774 = vunpack.c.l.b16 %v241
    %v775 = vunpack.c.h.b16 %v241
    %v776 = vunpack.c.l.b16 %v242
    %v777 = vunpack.c.l.b16 %v243
    %v778 = vunpack.c.h.b16 %v243
    %v779 = vunpack.c.l.b16 %v244
    %v780 = vunpack.c.l.b16 %v245
    %v781 = vunpack.c.h.b16 %v245
    %v782 = vunpack.c.l.b16 %v246
    %v783 = vunpack.c.l.b16 %v247
    %v784 = vunpack.c.h.b16 %v247
    %v785 = vunpack.c.l.b16 %v248
    %v786 = vunpack.c.l.b16 %v249
    %v787 = vunpack.c.h.b16 %v249
    %v788 = vunpack.c.l.b16 %v250
    %v789 = vunpack.c.l.b16 %v251
    %v790 = vunpack.c.h.b16 %v251
    %v791 = vunpack.c.l.b16 %v252
    %v792 = vunpack.c.l.b16 %v253
    %v793 = vunpack.c.h.b16 %v253
    %v794 = vunpack.c.l.b16 %v254
    %v795 = vunpack.c.l.b16 %v255
    %v796 = vunpack.c.h.b16 %v255
    %v797 = vunpack.c.l.b16 %v256
    %v798 = vunpack.c.l.b16 %v257
    %v799 = vunpack.c.h.b16 %v257
    %v800 = vunpack.c.l.b16 %v258
    %v801 = vpack.c.b16 %v510, %v507
    %v802 = vpack.c.b16 %v511, %v508
    %v803 = vpack.c.b16 %v512, %v509
    %v804 = vpack.c.b16 %v516, %v513
    %v805 = vpack.c.b16 %v517, %v514
    %v806 = vpack.c.b16 %v518, %v515
    %v807 = vpack.c.b16 %v522, %v519
    %v808 = vpack.c.b16 %v523, %v520
    %v809 = vpack.c.b16 %v524, %v521
    %v810 = vpack.c.b16 %v528, %v525
    %v811 = vpack.c.b16 %v529, %v526
    %v812 = vpack.c.b16 %v530, %v527
    %v813 = vpack.c.b16 %v534, %v531
    %v814 = vpack.c.b16 %v535, %v532
    %v815 = vpack.c.b16 %v536, %v533
    %v816 = vpack.c.b16 %v540, %v537
    %v817 = vpack.c.b16 %v541, %v538
    %v818 = vpack.c.b16 %v542, %v539
    %v819 = vpack.c.b16 %v546, %v543
    %v820 = vpack.c.b16 %v547, %v544
    %v821 = vpack.c.b16 %v548, %v545
    %v822 = vpack.c.b16 %v552, %v549
    %v823 = vpack.c.b16 %v553, %v550
    %v824 = vpack.c.b16 %v554, %v551
    %v825 = vpack.c.b16 %v558, %v555
    %v826 = vpack.c.b16 %v559, %v556
    %v827 = vpack.c.b16 %v560, %v557
    %v828 = vpack.c.b16 %v564, %v561
    %v829 = vpack.c.b16 %v565, %v562
    %v830 = vpack.c.b16 %v566, %v563
    %v831 = vpack.c.b16 %v570, %v567
    %v832 = vpack.c.b16 %v571, %v568
    %v833 = vpack.c.b16 %v572, %v569
    %v834 = vpack.c.b16 %v576, %v573
    %v835 = vpack.c.b16 %v577, %v574
    %v836 = vpack.c.b16 %v578, %v575
    %v837 = vpack.c.b16 %v582, %v579
    %v838 = vpack.c.b16 %v583, %v580
    %v839 = vpack.c.b16 %v584, %v581
    %v840 = vpack.c.b16 %v588, %v585
    %v841 = vpack.c.b16 %v589, %v586
    %v842 = vpack.c.b16 %v590, %v587
    %v843 = vpack.c.b16 %v594, %v591
    %v844 = vpack.c.b16 %v595, %v592
    %v845 = vpack.c.b16 %v596, %v593
    %v846 = vpack.c.b16 %v600, %v597
    %v847 = vpack.c.b16 %v601, %v598
    %v848 = vpack.c.b16 %v602, %v599
    %v849 = vpack.c.b16 %v606, %v603
    %v850 = vpack.c.b16 %v607, %v604
    %v851 = vpack.c.b16 %v608, %v605
    %v852 = vpack.c.b16 %v612, %v609
    %v853 = vpack.c.b16 %v613, %v610
    %v854 = vpack.c.b16 %v614, %v611
    %v855 = vpack.c.b16 %v618, %v615
    %v856 = vpack.c.b16 %v619, %v616
    %v857 = vpack.c.b16 %v620, %v617
    %v858 = vpack.c.b16 %v624, %v621
    %v859 = vpack.c.b16 %v625, %v622
    %v860 = vpack.c.b16 %v626, %v623
    %v861 = vpack.c.b16 %v630, %v627
    %v862 = vpack.c.b16 %v631, %v628
    %v863 = vpack.c.b16 %v632, %v629
    %v864 = vpack.c.b16 %v636, %v633
    %v865 = vpack.c.b16 %v637, %v634
    %v866 = vpack.c.b16 %v638, %v635
    %v867 = vpack.c.b16 %v642, %v639
    %v868 = vpack.c.b16 %v643, %v640
    %v869 = vpack.c.b16 %v644, %v641
    %v870 = vpack.c.b16 %v648, %v645
    %v871 = vpack.c.b16 %v649, %v646
    %v872 = vpack.c.b16 %v650, %v647
    %v873 = vpack.c.b16 %v654, %v651
    %v874 = vpack.c.b16 %v655, %v652
    %v875 = vpack.c.b16 %v656, %v653
    %v876 = vpack.c.b16 %v660, %v657
    %v877 = vpack.c.b16 %v661, %v658
    %v878 = vpack.c.b16 %v662, %v659
    %v879 = vpack.c.b16 %v666, %v663
    %v880 = vpack.c.b16 %v667, %v664
    %v881 = vpack.c.b16 %v668, %v665
    %v882 = vpack.c.b16 %v672, %v669
    %v883 = vpack.c.b16 %v673, %v670
    %v884 = vpack.c.b16 %v674, %v671
    %v885 = vpack.c.b16 %v678, %v675
    %v886 = vpack.c.b16 %v679, %v676
    %v887 = vpack.c.b16 %v680, %v677
    %v888 = vpack.c.b16 %v684, %v681
    %v889 = vpack.c.b16 %v685, %v682
    %v890 = vpack.c.b16 %v686, %v683
    %v891 = vpack.c.b16 %v690, %v687
    %v892 = vpack.c.b16 %v691, %v688
    %v893 = vpack.c.b16 %v692, %v689
    %v894 = vpack.c.b16 %v696, %v693
    %v895 = vpack.c.b16 %v697, %v694
    %v896 = vpack.c.b16 %v698, %v695
    %v897 = vpack.c.b16 %v702, %v699
    %v898 = vpack.c.b16 %v703, %v700
    %v899 = vpack.c.b16 %v704, %v701
    %v900 = vpack.c.b16 %v708, %v705
    %v901 = vpack.c.b16 %v709, %v706
    %v902 = vpack.c.b16 %v710, %v707
    %v903 = vpack.c.b16 %v714, %v711
    %v904 = vpack.c.b16 %v715, %v712
    %v905 = vpack.c.b16 %v716, %v713
    %v906 = vpack.c.b16 %v720, %v717
    %v907 = vpack.c.b16 %v721, %v718
    %v908 = vpack.c.b16 %v722, %v719
    %v909 = vpack.c.b16 %v726, %v723
    %v910 = vpack.c.b16 %v727, %v724
    %v911 = vpack.c.b16 %v728, %v725
    %v912 = vpack.c.b16 %v732, %v729
    %v913 = vpack.c.b16 %v733, %v730
    %v914 = vpack.c.b16 %v734, %v731
    %v915 = vpack.c.b16 %v738, %v735
    %v916 = vpack.c.b16 %v739, %v736
    %v917 = vpack.c.b16 %v740, %v737
    %v918 = vpack.c.b16 %v744, %v741
    %v919 = vpack.c.b16 %v745, %v742
    %v920 = vpack.c.b16 %v746, %v743
    %v921 = vpack.c.b16 %v750, %v747
    %v922 = vpack.c.b16 %v751, %v748
    %v923 = vpack.c.b16 %v752, %v749
    %v924 = vpack.c.b16 %v756, %v753
    %v925 = vpack.c.b16 %v757, %v754
    %v926 = vpack.c.b16 %v758, %v755
    %v927 = vpack.c.b16 %v762, %v759
    %v928 = vpack.c.b16 %v763, %v760
    %v929 = vpack.c.b16 %v764, %v761
    %v930 = vpack.c.b16 %v768, %v765
    %v931 = vpack.c.b16 %v769, %v766
    %v932 = vpack.c.b16 %v770, %v767
    %v933 = vpack.c.b16 %v774, %v771
    %v934 = vpack.c.b16 %v775, %v772
    %v935 = vpack.c.b16 %v776, %v773
    %v936 = vpack.c.b16 %v780, %v777
    %v937 = vpack.c.b16 %v781, %v778
    %v938 = vpack.c.b16 %v782, %v779
    %v939 = vpack.c.b16 %v786, %v783
    %v940 = vpack.c.b16 %v787, %v784
    %v941 = vpack.c.b16 %v788, %v785
    %v942 = vpack.c.b16 %v792, %v789
    %v943 = vpack.c.b16 %v793, %v790
    %v944 = vpack.c.b16 %v794, %v791
    %v945 = vpack.c.b16 %v798, %v795
    %v946 = vpack.c.b16 %v799, %v796
    %v947 = vpack.c.b16 %v800, %v797
    %vm1095 = vcmask 130048
    %v1097 = vsel %vm1095, %v304, 0
    %1099 = vmatprep.subr.bf16.mxu0 %v802
    %1100 = vmatpush1.bf16.msra.mxu0 %v801
    %1101 = vmatprep.subr.bf16.mxu0 %v805
    %1102 = vmatpush1.bf16.msra.mxu0 %v804
    %1103 = vmatprep.subr.bf16.mxu0 %v808
    %1104 = vmatpush1.bf16.msra.mxu0 %v807
    %1105 = vmatprep.subr.bf16.mxu0 %v811
    %1106 = vmatpush1.bf16.msra.mxu0 %v810
    %1107 = vmatprep.subr.bf16.mxu0 %v814
    %1108 = vmatpush1.bf16.msra.mxu0 %v813
    %1109 = vmatprep.subr.bf16.mxu0 %v817
    %1110 = vmatpush1.bf16.msra.mxu0 %v816
    %1111 = vmatprep.subr.bf16.mxu0 %v820
    %1112 = vmatpush1.bf16.msra.mxu0 %v819
    %1113 = vmatprep.subr.bf16.mxu0 %v823
    %1114 = vmatpush1.bf16.msra.mxu0 %v822
    %1115 = vmatprep.subr.bf16.mxu0 %v826
    %1116 = vmatpush1.bf16.msra.mxu0 %v825
    %1117 = vmatprep.subr.bf16.mxu0 %v829
    %1118 = vmatpush1.bf16.msra.mxu0 %v828
    %1119 = vmatprep.subr.bf16.mxu0 %v832
    %1120 = vmatpush1.bf16.msra.mxu0 %v831
    %1121 = vmatprep.subr.bf16.mxu0 %v835
    %1122 = vmatpush1.bf16.msra.mxu0 %v834
    %1123 = vmatprep.subr.bf16.mxu0 %v838
    %1124 = vmatpush1.bf16.msra.mxu0 %v837
    %1125 = vmatprep.subr.bf16.mxu0 %v841
    %1126 = vmatpush1.bf16.msra.mxu0 %v840
    %1127 = vmatprep.subr.bf16.mxu0 %v844
    %1128 = vmatpush1.bf16.msra.mxu0 %v843
    %1129 = vmatprep.subr.bf16.mxu0 %v847
    %1130 = vmatpush1.bf16.msra.mxu0 %v846
    %1131 = vmatprep.mubr.bf16.mxu0 %v299
    %1132 = vmatmul.mubr.bf16.gmra.mrb[0].mxu0 %v298
    %v1133 = vpop.f32.mrb[0].mxu0
    %v1134 = vadd.f32 %v264, %v1133
    %v1135 = vpop.f32.mrb[0].mxu0
    %v1136 = vadd.f32 %v268, %v1135
    %v1137 = vpop.f32.mrb[0].mxu0
    %v1138 = vadd.f32 %v264, %v1137
    %v1139 = vpop.f32.mrb[0].mxu0
    %v1140 = vadd.f32 %v268, %v1139
    %1141 = vdwg.mxu0
    %1142 = vmatprep.subr.bf16.mxu0 %v850
    %1143 = vmatpush1.bf16.msra.mxu0 %v849
    %1144 = vmatprep.subr.bf16.mxu0 %v853
    %1145 = vmatpush1.bf16.msra.mxu0 %v852
    %1146 = vmatprep.subr.bf16.mxu0 %v856
    %1147 = vmatpush1.bf16.msra.mxu0 %v855
    %1148 = vmatprep.subr.bf16.mxu0 %v859
    %1149 = vmatpush1.bf16.msra.mxu0 %v858
    %1150 = vmatprep.subr.bf16.mxu0 %v862
    %1151 = vmatpush1.bf16.msra.mxu0 %v861
    %1152 = vmatprep.subr.bf16.mxu0 %v865
    %1153 = vmatpush1.bf16.msra.mxu0 %v864
    %1154 = vmatprep.subr.bf16.mxu0 %v868
    %1155 = vmatpush1.bf16.msra.mxu0 %v867
    %1156 = vmatprep.subr.bf16.mxu0 %v871
    %1157 = vmatpush1.bf16.msra.mxu0 %v870
    %1158 = vmatprep.subr.bf16.mxu0 %v874
    %1159 = vmatpush1.bf16.msra.mxu0 %v873
    %1160 = vmatprep.subr.bf16.mxu0 %v877
    %1161 = vmatpush1.bf16.msra.mxu0 %v876
    %1162 = vmatprep.subr.bf16.mxu0 %v880
    %1163 = vmatpush1.bf16.msra.mxu0 %v879
    %1164 = vmatprep.subr.bf16.mxu0 %v883
    %1165 = vmatpush1.bf16.msra.mxu0 %v882
    %1166 = vmatprep.subr.bf16.mxu0 %v886
    %1167 = vmatpush1.bf16.msra.mxu0 %v885
    %1168 = vmatprep.subr.bf16.mxu0 %v889
    %1169 = vmatpush1.bf16.msra.mxu0 %v888
    %1170 = vmatprep.subr.bf16.mxu0 %v892
    %1171 = vmatpush1.bf16.msra.mxu0 %v891
    %1172 = vmatprep.subr.bf16.mxu0 %v895
    %1173 = vmatpush1.bf16.msra.mxu0 %v894
    %1174 = vmatprep.mubr.bf16.mxu0 %v301
    %1175 = vmatmul.mubr.bf16.gmra.mrb[0].mxu0 %v300
    %v1176 = vpop.f32.mrb[0].mxu0
    %v1177 = vadd.f32 %v1134, %v1176
    %v1178 = vpop.f32.mrb[0].mxu0
    %v1179 = vadd.f32 %v1136, %v1178
    %v1180 = vpop.f32.mrb[0].mxu0
    %v1181 = vadd.f32 %v1138, %v1180
    %v1182 = vpop.f32.mrb[0].mxu0
    %v1183 = vadd.f32 %v1140, %v1182
    %1184 = vdwg.mxu0
    %1185 = vmatprep.subr.bf16.mxu0 %v898
    %1186 = vmatpush1.bf16.msra.mxu0 %v897
    %1187 = vmatprep.subr.bf16.mxu0 %v901
    %1188 = vmatpush1.bf16.msra.mxu0 %v900
    %1189 = vmatprep.subr.bf16.mxu0 %v904
    %1190 = vmatpush1.bf16.msra.mxu0 %v903
    %1191 = vmatprep.subr.bf16.mxu0 %v907
    %1192 = vmatpush1.bf16.msra.mxu0 %v906
    %1193 = vmatprep.subr.bf16.mxu0 %v910
    %1194 = vmatpush1.bf16.msra.mxu0 %v909
    %1195 = vmatprep.subr.bf16.mxu0 %v913
    %1196 = vmatpush1.bf16.msra.mxu0 %v912
    %1197 = vmatprep.subr.bf16.mxu0 %v916
    %1198 = vmatpush1.bf16.msra.mxu0 %v915
    %1199 = vmatprep.subr.bf16.mxu0 %v919
    %1200 = vmatpush1.bf16.msra.mxu0 %v918
    %1201 = vmatprep.subr.bf16.mxu0 %v922
    %1202 = vmatpush1.bf16.msra.mxu0 %v921
    %1203 = vmatprep.subr.bf16.mxu0 %v925
    %1204 = vmatpush1.bf16.msra.mxu0 %v924
    %1205 = vmatprep.subr.bf16.mxu0 %v928
    %1206 = vmatpush1.bf16.msra.mxu0 %v927
    %1207 = vmatprep.subr.bf16.mxu0 %v931
    %1208 = vmatpush1.bf16.msra.mxu0 %v930
    %1209 = vmatprep.subr.bf16.mxu0 %v934
    %1210 = vmatpush1.bf16.msra.mxu0 %v933
    %1211 = vmatprep.subr.bf16.mxu0 %v937
    %1212 = vmatpush1.bf16.msra.mxu0 %v936
    %1213 = vmatprep.subr.bf16.mxu0 %v940
    %1214 = vmatpush1.bf16.msra.mxu0 %v939
    %1215 = vmatprep.subr.bf16.mxu0 %v943
    %1216 = vmatpush1.bf16.msra.mxu0 %v942
    %1217 = vmatprep.mubr.bf16.mxu0 %v303
    %1218 = vmatmul.mubr.bf16.gmra.mrb[0].mxu0 %v302
    %v1219 = vpop.f32.mrb[0].mxu0
    %v1220 = vadd.f32 %v1177, %v1219
    %v1221 = vpop.f32.mrb[0].mxu0
    %v1222 = vadd.f32 %v1179, %v1221
    %v1223 = vpop.f32.mrb[0].mxu0
    %v1224 = vadd.f32 %v1181, %v1223
    %v1225 = vpop.f32.mrb[0].mxu0
    %v1226 = vadd.f32 %v1183, %v1225
    %1227 = vdwg.mxu0
    %1228 = vmatprep.subr.bf16.mxu0 %v946
    %1229 = vmatpush1.bf16.msra.mxu0 %v945
    %1230 = vmatprep.subr.bf16.mxu0 0
    %1231 = vmatpush1.bf16.msra.mxu0 0
    %1232 = vmatprep.subr.bf16.mxu0 0
    %1233 = vmatpush1.bf16.msra.mxu0 0
    %1234 = vmatprep.subr.bf16.mxu0 0
    %1235 = vmatpush1.bf16.msra.mxu0 0
    %1236 = vmatprep.subr.bf16.mxu0 0
    %1237 = vmatpush1.bf16.msra.mxu0 0
    %1238 = vmatprep.subr.bf16.mxu0 0
    %1239 = vmatpush1.bf16.msra.mxu0 0
    %1240 = vmatprep.subr.bf16.mxu0 0
    %1241 = vmatpush1.bf16.msra.mxu0 0
    %1242 = vmatprep.subr.bf16.mxu0 0
    %1243 = vmatpush1.bf16.msra.mxu0 0
    %1244 = vmatprep.subr.bf16.mxu0 0
    %1245 = vmatpush1.bf16.msra.mxu0 0
    %1246 = vmatprep.subr.bf16.mxu0 0
    %1247 = vmatpush1.bf16.msra.mxu0 0
    %1248 = vmatprep.subr.bf16.mxu0 0
    %1249 = vmatpush1.bf16.msra.mxu0 0
    %1250 = vmatprep.subr.bf16.mxu0 0
    %1251 = vmatpush1.bf16.msra.mxu0 0
    %1252 = vmatprep.subr.bf16.mxu0 0
    %1253 = vmatpush1.bf16.msra.mxu0 0
    %1254 = vmatprep.subr.bf16.mxu0 0
    %1255 = vmatpush1.bf16.msra.mxu0 0
    %1256 = vmatprep.subr.bf16.mxu0 0
    %1257 = vmatpush1.bf16.msra.mxu0 0
    %1258 = vmatprep.subr.bf16.mxu0 0
    %1259 = vmatpush1.bf16.msra.mxu0 0
    %1260 = vmatprep.mubr.bf16.mxu0 0
    %1261 = vmatmul.mubr.bf16.gmra.mrb[0].mxu0 %v1097
    %v1262 = vpop.f32.mrb[0].mxu0
    %v1263 = vadd.f32 %v1220, %v1262
    %v1264 = vpop.f32.mrb[0].mxu0
    %v1265 = vadd.f32 %v1222, %v1264
    %v1266 = vpop.f32.mrb[0].mxu0
    %v1267 = vadd.f32 %v1224, %v1266
    %v1268 = vpop.f32.mrb[0].mxu0
    %v1269 = vadd.f32 %v1226, %v1268
    %1270 = vdwg.mxu0
    %1271 = vmatprep.subr.bf16.mxu0 0
    %1272 = vmatpush1.bf16.msra.mxu0 %v803
    %1273 = vmatprep.subr.bf16.mxu0 0
    %1274 = vmatpush1.bf16.msra.mxu0 %v806
    %1275 = vmatprep.subr.bf16.mxu0 0
    %1276 = vmatpush1.bf16.msra.mxu0 %v809
    %1277 = vmatprep.subr.bf16.mxu0 0
    %1278 = vmatpush1.bf16.msra.mxu0 %v812
    %1279 = vmatprep.subr.bf16.mxu0 0
    %1280 = vmatpush1.bf16.msra.mxu0 %v815
    %1281 = vmatprep.subr.bf16.mxu0 0
    %1282 = vmatpush1.bf16.msra.mxu0 %v818
    %1283 = vmatprep.subr.bf16.mxu0 0
    %1284 = vmatpush1.bf16.msra.mxu0 %v821
    %1285 = vmatprep.subr.bf16.mxu0 0
    %1286 = vmatpush1.bf16.msra.mxu0 %v824
    %1287 = vmatprep.subr.bf16.mxu0 0
    %1288 = vmatpush1.bf16.msra.mxu0 %v827
    %1289 = vmatprep.subr.bf16.mxu0 0
    %1290 = vmatpush1.bf16.msra.mxu0 %v830
    %1291 = vmatprep.subr.bf16.mxu0 0
    %1292 = vmatpush1.bf16.msra.mxu0 %v833
    %1293 = vmatprep.subr.bf16.mxu0 0
    %1294 = vmatpush1.bf16.msra.mxu0 %v836
    %1295 = vmatprep.subr.bf16.mxu0 0
    %1296 = vmatpush1.bf16.msra.mxu0 %v839
    %1297 = vmatprep.subr.bf16.mxu0 0
    %1298 = vmatpush1.bf16.msra.mxu0 %v842
    %1299 = vmatprep.subr.bf16.mxu0 0
    %1300 = vmatpush1.bf16.msra.mxu0 %v845
    %1301 = vmatprep.subr.bf16.mxu0 0
    %1302 = vmatpush1.bf16.msra.mxu0 %v848
    %1303 = vmatprep.mubr.bf16.mxu0 %v299
    %1304 = vmatmul.mubr.bf16.gmra.mrb[0].mxu0 %v298
    %v1305 = vpop.f32.mrb[0].mxu0
    %v1306 = vadd.f32 %v272, %v1305
    %v1307 = vpop.f32.mrb[0].mxu0
    %v1308 = vpop.f32.mrb[0].mxu0
    %v1309 = vadd.f32 %v272, %v1308
    %v1310 = vpop.f32.mrb[0].mxu0
    %1311 = vdwg.mxu0
    %1312 = vmatprep.subr.bf16.mxu0 0
    %1313 = vmatpush1.bf16.msra.mxu0 %v851
    %1314 = vmatprep.subr.bf16.mxu0 0
    %1315 = vmatpush1.bf16.msra.mxu0 %v854
    %1316 = vmatprep.subr.bf16.mxu0 0
    %1317 = vmatpush1.bf16.msra.mxu0 %v857
    %1318 = vmatprep.subr.bf16.mxu0 0
    %1319 = vmatpush1.bf16.msra.mxu0 %v860
    %1320 = vmatprep.subr.bf16.mxu0 0
    %1321 = vmatpush1.bf16.msra.mxu0 %v863
    %1322 = vmatprep.subr.bf16.mxu0 0
    %1323 = vmatpush1.bf16.msra.mxu0 %v866
    %1324 = vmatprep.subr.bf16.mxu0 0
    %1325 = vmatpush1.bf16.msra.mxu0 %v869
    %1326 = vmatprep.subr.bf16.mxu0 0
    %1327 = vmatpush1.bf16.msra.mxu0 %v872
    %1328 = vmatprep.subr.bf16.mxu0 0
    %1329 = vmatpush1.bf16.msra.mxu0 %v875
    %1330 = vmatprep.subr.bf16.mxu0 0
    %1331 = vmatpush1.bf16.msra.mxu0 %v878
    %1332 = vmatprep.subr.bf16.mxu0 0
    %1333 = vmatpush1.bf16.msra.mxu0 %v881
    %1334 = vmatprep.subr.bf16.mxu0 0
    %1335 = vmatpush1.bf16.msra.mxu0 %v884
    %1336 = vmatprep.subr.bf16.mxu0 0
    %1337 = vmatpush1.bf16.msra.mxu0 %v887
    %1338 = vmatprep.subr.bf16.mxu0 0
    %1339 = vmatpush1.bf16.msra.mxu0 %v890
    %1340 = vmatprep.subr.bf16.mxu0 0
    %1341 = vmatpush1.bf16.msra.mxu0 %v893
    %1342 = vmatprep.subr.bf16.mxu0 0
    %1343 = vmatpush1.bf16.msra.mxu0 %v896
    %1344 = vmatprep.mubr.bf16.mxu0 %v301
    %1345 = vmatmul.mubr.bf16.gmra.mrb[0].mxu0 %v300
    %v1346 = vpop.f32.mrb[0].mxu0
    %v1347 = vadd.f32 %v1306, %v1346
    %v1348 = vpop.f32.mrb[0].mxu0
    %v1349 = vpop.f32.mrb[0].mxu0
    %v1350 = vadd.f32 %v1309, %v1349
    %v1351 = vpop.f32.mrb[0].mxu0
    %1352 = vdwg.mxu0
    %1353 = vmatprep.subr.bf16.mxu0 0
    %1354 = vmatpush1.bf16.msra.mxu0 %v899
    %1355 = vmatprep.subr.bf16.mxu0 0
    %1356 = vmatpush1.bf16.msra.mxu0 %v902
    %1357 = vmatprep.subr.bf16.mxu0 0
    %1358 = vmatpush1.bf16.msra.mxu0 %v905
    %1359 = vmatprep.subr.bf16.mxu0 0
    %1360 = vmatpush1.bf16.msra.mxu0 %v908
    %1361 = vmatprep.subr.bf16.mxu0 0
    %1362 = vmatpush1.bf16.msra.mxu0 %v911
    %1363 = vmatprep.subr.bf16.mxu0 0
    %1364 = vmatpush1.bf16.msra.mxu0 %v914
    %1365 = vmatprep.subr.bf16.mxu0 0
    %1366 = vmatpush1.bf16.msra.mxu0 %v917
    %1367 = vmatprep.subr.bf16.mxu0 0
    %1368 = vmatpush1.bf16.msra.mxu0 %v920
    %1369 = vmatprep.subr.bf16.mxu0 0
    %1370 = vmatpush1.bf16.msra.mxu0 %v923
    %1371 = vmatprep.subr.bf16.mxu0 0
    %1372 = vmatpush1.bf16.msra.mxu0 %v926
    %1373 = vmatprep.subr.bf16.mxu0 0
    %1374 = vmatpush1.bf16.msra.mxu0 %v929
    %1375 = vmatprep.subr.bf16.mxu0 0
    %1376 = vmatpush1.bf16.msra.mxu0 %v932
    %1377 = vmatprep.subr.bf16.mxu0 0
    %1378 = vmatpush1.bf16.msra.mxu0 %v935
    %1379 = vmatprep.subr.bf16.mxu0 0
    %1380 = vmatpush1.bf16.msra.mxu0 %v938
    %1381 = vmatprep.subr.bf16.mxu0 0
    %1382 = vmatpush1.bf16.msra.mxu0 %v941
    %1383 = vmatprep.subr.bf16.mxu0 0
    %1384 = vmatpush1.bf16.msra.mxu0 %v944
    %1385 = vmatprep.mubr.bf16.mxu0 %v303
    %1386 = vmatmul.mubr.bf16.gmra.mrb[0].mxu0 %v302
    %v1387 = vpop.f32.mrb[0].mxu0
    %v1388 = vadd.f32 %v1347, %v1387
    %v1389 = vpop.f32.mrb[0].mxu0
    %v1390 = vpop.f32.mrb[0].mxu0
    %v1391 = vadd.f32 %v1350, %v1390
    %v1392 = vpop.f32.mrb[0].mxu0
    %1393 = vdwg.mxu0
    %1394 = vmatprep.subr.bf16.mxu0 0
    %1395 = vmatpush1.bf16.msra.mxu0 %v947
    %1396 = vmatprep.subr.bf16.mxu0 0
    %1397 = vmatpush1.bf16.msra.mxu0 0
    %1398 = vmatprep.subr.bf16.mxu0 0
    %1399 = vmatpush1.bf16.msra.mxu0 0
    %1400 = vmatprep.subr.bf16.mxu0 0
    %1401 = vmatpush1.bf16.msra.mxu0 0
    %1402 = vmatprep.subr.bf16.mxu0 0
    %1403 = vmatpush1.bf16.msra.mxu0 0
    %1404 = vmatprep.subr.bf16.mxu0 0
    %1405 = vmatpush1.bf16.msra.mxu0 0
    %1406 = vmatprep.subr.bf16.mxu0 0
    %1407 = vmatpush1.bf16.msra.mxu0 0
    %1408 = vmatprep.subr.bf16.mxu0 0
    %1409 = vmatpush1.bf16.msra.mxu0 0
    %1410 = vmatprep.subr.bf16.mxu0 0
    %1411 = vmatpush1.bf16.msra.mxu0 0
    %1412 = vmatprep.subr.bf16.mxu0 0
    %1413 = vmatpush1.bf16.msra.mxu0 0
    %1414 = vmatprep.subr.bf16.mxu0 0
    %1415 = vmatpush1.bf16.msra.mxu0 0
    %1416 = vmatprep.subr.bf16.mxu0 0
    %1417 = vmatpush1.bf16.msra.mxu0 0
    %1418 = vmatprep.subr.bf16.mxu0 0
    %1419 = vmatpush1.bf16.msra.mxu0 0
    %1420 = vmatprep.subr.bf16.mxu0 0
    %1421 = vmatpush1.bf16.msra.mxu0 0
    %1422 = vmatprep.subr.bf16.mxu0 0
    %1423 = vmatpush1.bf16.msra.mxu0 0
    %1424 = vmatprep.subr.bf16.mxu0 0
    %1425 = vmatpush1.bf16.msra.mxu0 0
    %1426 = vmatprep.mubr.bf16.mxu0 0
    %1427 = vmatmul.mubr.bf16.gmra.mrb[0].mxu0 %v1097
    %v1428 = vpop.f32.mrb[0].mxu0
    %v1429 = vadd.f32 %v1388, %v1428
    %v1430 = vpop.f32.mrb[0].mxu0
    %v1431 = vpop.f32.mrb[0].mxu0
    %v1432 = vadd.f32 %v1391, %v1431
    %v1433 = vpop.f32.mrb[0].mxu0
    %1434 = vdwg.mxu0
    %v1435 = vmax.f32 %v1263, 0.0
    %v1436 = vmax.f32 %v1265, 0.0
    %v1437 = vmax.f32 %v1429, 0.0
    %v1438 = vmax.f32 %v1267, 0.0
    %v1439 = vmax.f32 %v1269, 0.0
    %v1440 = vmax.f32 %v1432, 0.0
    %v1441 = vpack.c.bf16 %v1438, %v1435
    %v1442 = vpack.c.bf16 %v1439, %v1436
    %v1443 = vpack.c.bf16 %v1440, %v1437
    %v1444 = vld [vmem:[#allocation4] sm:$0xff]
    %v1445 = vld [vmem:[#allocation4 + $0x8] sm:$0xff]
    %v1446 = vld [vmem:[#allocation4 + $0x10] sm:$0xff]
    %v1447 = vld [vmem:[#allocation4 + $0x18] sm:$0xff]
    %v1448 = vld [vmem:[#allocation4 + $0x20] sm:$0xff]
    %v1449 = vld [vmem:[#allocation4 + $0x28] sm:$0xff]
    %v1450 = vld [vmem:[#allocation4 + $0x30] sm:$0xff]
    %v1451 = vld [vmem:[#allocation4 + $0x38] sm:$0xff]
    %v1452 = vld [vmem:[#allocation4 + $0x40] sm:$0xff]
    %v1453 = vld [vmem:[#allocation4 + $0x48] sm:$0xff]
    %v1454 = vld [vmem:[#allocation4 + $0x50] sm:$0xff]
    %v1455 = vld [vmem:[#allocation4 + $0x58] sm:$0xff]
    %v1456 = vld [vmem:[#allocation4 + $0x60] sm:$0xff]
    %v1457 = vld [vmem:[#allocation4 + $0x68] sm:$0xff]
    %v1458 = vld [vmem:[#allocation4 + $0x70] sm:$0xff]
    %v1459 = vld [vmem:[#allocation4 + $0x78] sm:$0xff]
    %v1460 = vld [vmem:[#allocation4 + $0x80] sm:$0xff]
    %v1461 = vld [vmem:[#allocation4 + $0x88] sm:$0xff]
    %v1462 = vld [vmem:[#allocation4 + $0x90] sm:$0xff]
    %v1463 = vld [vmem:[#allocation4 + $0x98] sm:$0xff]
    %v1464 = vld [vmem:[#allocation4 + $0xa0] sm:$0xff]
    %v1465 = vld [vmem:[#allocation4 + $0xa8] sm:$0xff]
    %v1466 = vld [vmem:[#allocation4 + $0xb0] sm:$0xff]
    %v1467 = vld [vmem:[#allocation4 + $0xb8] sm:$0xff]
    %v1468 = vld [vmem:[#allocation4 + $0xc0] sm:$0xff]
    %v1469 = vld [vmem:[#allocation4 + $0xc8] sm:$0xff]
    %v1470 = vld [vmem:[#allocation4 + $0xd0] sm:$0xff]
    %v1471 = vld [vmem:[#allocation4 + $0xd8] sm:$0xff]
    %v1472 = vld [vmem:[#allocation4 + $0xe0] sm:$0xff]
    %v1473 = vld [vmem:[#allocation4 + $0xe8] sm:$0xff]
    %v1474 = vld [vmem:[#allocation4 + $0xf0] sm:$0xff]
    %v1475 = vld [vmem:[#allocation4 + $0xf8] sm:$0xff]
    %v1476 = vld [vmem:[#allocation4 + $0x100] sm:$0xff]
    %v1477 = vld [vmem:[#allocation4 + $0x108] sm:$0xff]
    %v1478 = vld [vmem:[#allocation4 + $0x110] sm:$0xff]
    %v1479 = vld [vmem:[#allocation4 + $0x118] sm:$0xff]
    %v1480 = vld [vmem:[#allocation4 + $0x120] sm:$0xff]
    %v1481 = vld [vmem:[#allocation4 + $0x128] sm:$0xff]
    %v1482 = vld [vmem:[#allocation4 + $0x130] sm:$0xff]
    %v1483 = vld [vmem:[#allocation4 + $0x138] sm:$0xff]
    %v1484 = vld [vmem:[#allocation4 + $0x140] sm:$0xff]
    %v1485 = vld [vmem:[#allocation4 + $0x148] sm:$0xff]
    %v1486 = vld [vmem:[#allocation4 + $0x150] sm:$0xff]
    %v1487 = vld [vmem:[#allocation4 + $0x158] sm:$0xff]
    %v1488 = vld [vmem:[#allocation4 + $0x160] sm:$0xff]
    %v1489 = vld [vmem:[#allocation4 + $0x168] sm:$0xff]
    %v1490 = vld [vmem:[#allocation4 + $0x170] sm:$0xff]
    %v1491 = vld [vmem:[#allocation4 + $0x178] sm:$0xff]
    %v1492 = vld [vmem:[%s4] sm:$0x3]
    %v1494 = vlaneseq
    %v1495 = vshrl.u32 %v1494, 7
    %v1496 = vsub.s32 0, %v1495
    %v1497 = vrot.slane %v1492, %v1496
    %v1498 = vlaneseq
    %v1499 = vshrl.u32 %v1498, 7
    %v1500 = vsub.s32 1, %v1499
    %v1501 = vrot.slane %v1492, %v1500
    %v1552 = vunpack.c.l.b16 %v1444
    %v1553 = vunpack.c.h.b16 %v1444
    %v1554 = vunpack.c.l.b16 %v1445
    %v1555 = vunpack.c.h.b16 %v1445
    %v1556 = vunpack.c.l.b16 %v1446
    %v1557 = vunpack.c.h.b16 %v1446
    %v1558 = vunpack.c.l.b16 %v1447
    %v1559 = vunpack.c.h.b16 %v1447
    %v1560 = vunpack.c.l.b16 %v1448
    %v1561 = vunpack.c.h.b16 %v1448
    %v1562 = vunpack.c.l.b16 %v1449
    %v1563 = vunpack.c.h.b16 %v1449
    %v1564 = vunpack.c.l.b16 %v1450
    %v1565 = vunpack.c.h.b16 %v1450
    %v1566 = vunpack.c.l.b16 %v1451
    %v1567 = vunpack.c.h.b16 %v1451
    %v1568 = vunpack.c.l.b16 %v1452
    %v1569 = vunpack.c.h.b16 %v1452
    %v1570 = vunpack.c.l.b16 %v1453
    %v1571 = vunpack.c.h.b16 %v1453
    %v1572 = vunpack.c.l.b16 %v1454
    %v1573 = vunpack.c.h.b16 %v1454
    %v1574 = vunpack.c.l.b16 %v1455
    %v1575 = vunpack.c.h.b16 %v1455
    %v1576 = vunpack.c.l.b16 %v1456
    %v1577 = vunpack.c.h.b16 %v1456
    %v1578 = vunpack.c.l.b16 %v1457
    %v1579 = vunpack.c.h.b16 %v1457
    %v1580 = vunpack.c.l.b16 %v1458
    %v1581 = vunpack.c.h.b16 %v1458
    %v1582 = vunpack.c.l.b16 %v1459
    %v1583 = vunpack.c.h.b16 %v1459
    %v1584 = vunpack.c.l.b16 %v1460
    %v1585 = vunpack.c.h.b16 %v1460
    %v1586 = vunpack.c.l.b16 %v1461
    %v1587 = vunpack.c.h.b16 %v1461
    %v1588 = vunpack.c.l.b16 %v1462
    %v1589 = vunpack.c.h.b16 %v1462
    %v1590 = vunpack.c.l.b16 %v1463
    %v1591 = vunpack.c.h.b16 %v1463
    %v1592 = vunpack.c.l.b16 %v1464
    %v1593 = vunpack.c.h.b16 %v1464
    %v1594 = vunpack.c.l.b16 %v1465
    %v1595 = vunpack.c.h.b16 %v1465
    %v1596 = vunpack.c.l.b16 %v1466
    %v1597 = vunpack.c.h.b16 %v1466
    %v1598 = vunpack.c.l.b16 %v1467
    %v1599 = vunpack.c.h.b16 %v1467
    %v1600 = vunpack.c.l.b16 %v1468
    %v1601 = vunpack.c.h.b16 %v1468
    %v1602 = vunpack.c.l.b16 %v1469
    %v1603 = vunpack.c.h.b16 %v1469
    %v1604 = vunpack.c.l.b16 %v1470
    %v1605 = vunpack.c.h.b16 %v1470
    %v1606 = vunpack.c.l.b16 %v1471
    %v1607 = vunpack.c.h.b16 %v1471
    %v1608 = vunpack.c.l.b16 %v1472
    %v1609 = vunpack.c.h.b16 %v1472
    %v1610 = vunpack.c.l.b16 %v1473
    %v1611 = vunpack.c.h.b16 %v1473
    %v1612 = vunpack.c.l.b16 %v1474
    %v1613 = vunpack.c.h.b16 %v1474
    %v1614 = vunpack.c.l.b16 %v1475
    %v1615 = vunpack.c.h.b16 %v1475
    %v1616 = vunpack.c.l.b16 %v1476
    %v1617 = vunpack.c.h.b16 %v1476
    %v1618 = vunpack.c.l.b16 %v1477
    %v1619 = vunpack.c.h.b16 %v1477
    %v1620 = vunpack.c.l.b16 %v1478
    %v1621 = vunpack.c.h.b16 %v1478
    %v1622 = vunpack.c.l.b16 %v1479
    %v1623 = vunpack.c.h.b16 %v1479
    %v1624 = vunpack.c.l.b16 %v1480
    %v1625 = vunpack.c.h.b16 %v1480
    %v1626 = vunpack.c.l.b16 %v1481
    %v1627 = vunpack.c.h.b16 %v1481
    %v1628 = vunpack.c.l.b16 %v1482
    %v1629 = vunpack.c.h.b16 %v1482
    %v1630 = vunpack.c.l.b16 %v1483
    %v1631 = vunpack.c.h.b16 %v1483
    %v1632 = vunpack.c.l.b16 %v1484
    %v1633 = vunpack.c.h.b16 %v1484
    %v1634 = vunpack.c.l.b16 %v1485
    %v1635 = vunpack.c.h.b16 %v1485
    %v1636 = vunpack.c.l.b16 %v1486
    %v1637 = vunpack.c.h.b16 %v1486
    %v1638 = vunpack.c.l.b16 %v1487
    %v1639 = vunpack.c.h.b16 %v1487
    %v1640 = vunpack.c.l.b16 %v1488
    %v1641 = vunpack.c.h.b16 %v1488
    %v1642 = vunpack.c.l.b16 %v1489
    %v1643 = vunpack.c.h.b16 %v1489
    %v1644 = vunpack.c.l.b16 %v1490
    %v1645 = vunpack.c.h.b16 %v1490
    %v1646 = vunpack.c.l.b16 %v1491
    %v1647 = vunpack.c.h.b16 %v1491
    %v1648 = vpack.c.b16 %v1554, %v1552
    %v1649 = vpack.c.b16 %v1555, %v1553
    %v1650 = vpack.c.b16 %v1558, %v1556
    %v1651 = vpack.c.b16 %v1559, %v1557
    %v1652 = vpack.c.b16 %v1562, %v1560
    %v1653 = vpack.c.b16 %v1563, %v1561
    %v1654 = vpack.c.b16 %v1566, %v1564
    %v1655 = vpack.c.b16 %v1567, %v1565
    %v1656 = vpack.c.b16 %v1570, %v1568
    %v1657 = vpack.c.b16 %v1571, %v1569
    %v1658 = vpack.c.b16 %v1574, %v1572
    %v1659 = vpack.c.b16 %v1575, %v1573
    %v1660 = vpack.c.b16 %v1578, %v1576
    %v1661 = vpack.c.b16 %v1579, %v1577
    %v1662 = vpack.c.b16 %v1582, %v1580
    %v1663 = vpack.c.b16 %v1583, %v1581
    %v1664 = vpack.c.b16 %v1586, %v1584
    %v1665 = vpack.c.b16 %v1587, %v1585
    %v1666 = vpack.c.b16 %v1590, %v1588
    %v1667 = vpack.c.b16 %v1591, %v1589
    %v1668 = vpack.c.b16 %v1594, %v1592
    %v1669 = vpack.c.b16 %v1595, %v1593
    %v1670 = vpack.c.b16 %v1598, %v1596
    %v1671 = vpack.c.b16 %v1599, %v1597
    %v1672 = vpack.c.b16 %v1602, %v1600
    %v1673 = vpack.c.b16 %v1603, %v1601
    %v1674 = vpack.c.b16 %v1606, %v1604
    %v1675 = vpack.c.b16 %v1607, %v1605
    %v1676 = vpack.c.b16 %v1610, %v1608
    %v1677 = vpack.c.b16 %v1611, %v1609
    %v1678 = vpack.c.b16 %v1614, %v1612
    %v1679 = vpack.c.b16 %v1615, %v1613
    %v1680 = vpack.c.b16 %v1618, %v1616
    %v1681 = vpack.c.b16 %v1619, %v1617
    %v1682 = vpack.c.b16 %v1622, %v1620
    %v1683 = vpack.c.b16 %v1623, %v1621
    %v1684 = vpack.c.b16 %v1626, %v1624
    %v1685 = vpack.c.b16 %v1627, %v1625
    %v1686 = vpack.c.b16 %v1630, %v1628
    %v1687 = vpack.c.b16 %v1631, %v1629
    %v1688 = vpack.c.b16 %v1634, %v1632
    %v1689 = vpack.c.b16 %v1635, %v1633
    %v1690 = vpack.c.b16 %v1638, %v1636
    %v1691 = vpack.c.b16 %v1639, %v1637
    %v1692 = vpack.c.b16 %v1642, %v1640
    %v1693 = vpack.c.b16 %v1643, %v1641
    %v1694 = vpack.c.b16 %v1646, %v1644
    %v1695 = vpack.c.b16 %v1647, %v1645
    %1744 = vmatprep.subr.bf16.mxu0 %v1649
    %1745 = vmatpush1.bf16.msra.mxu0 %v1648
    %1746 = vmatprep.subr.bf16.mxu0 %v1651
    %1747 = vmatpush1.bf16.msra.mxu0 %v1650
    %1748 = vmatprep.subr.bf16.mxu0 %v1653
    %1749 = vmatpush1.bf16.msra.mxu0 %v1652
    %1750 = vmatprep.subr.bf16.mxu0 %v1655
    %1751 = vmatpush1.bf16.msra.mxu0 %v1654
    %1752 = vmatprep.subr.bf16.mxu0 %v1657
    %1753 = vmatpush1.bf16.msra.mxu0 %v1656
    %1754 = vmatprep.subr.bf16.mxu0 %v1659
    %1755 = vmatpush1.bf16.msra.mxu0 %v1658
    %1756 = vmatprep.subr.bf16.mxu0 %v1661
    %1757 = vmatpush1.bf16.msra.mxu0 %v1660
    %1758 = vmatprep.subr.bf16.mxu0 %v1663
    %1759 = vmatpush1.bf16.msra.mxu0 %v1662
    %1760 = vmatprep.subr.bf16.mxu0 %v1665
    %1761 = vmatpush1.bf16.msra.mxu0 %v1664
    %1762 = vmatprep.subr.bf16.mxu0 %v1667
    %1763 = vmatpush1.bf16.msra.mxu0 %v1666
    %1764 = vmatprep.subr.bf16.mxu0 %v1669
    %1765 = vmatpush1.bf16.msra.mxu0 %v1668
    %1766 = vmatprep.subr.bf16.mxu0 %v1671
    %1767 = vmatpush1.bf16.msra.mxu0 %v1670
    %1768 = vmatprep.subr.bf16.mxu0 %v1673
    %1769 = vmatpush1.bf16.msra.mxu0 %v1672
    %1770 = vmatprep.subr.bf16.mxu0 %v1675
    %1771 = vmatpush1.bf16.msra.mxu0 %v1674
    %1772 = vmatprep.subr.bf16.mxu0 %v1677
    %1773 = vmatpush1.bf16.msra.mxu0 %v1676
    %1774 = vmatprep.subr.bf16.mxu0 %v1679
    %1775 = vmatpush1.bf16.msra.mxu0 %v1678
    %1776 = vmatprep.mubr.bf16.mxu0 %v1442
    %1777 = vmatmul.mubr.bf16.gmra.mrb[0].mxu0 %v1441
    %v1778 = vpop.f32.mrb[0].mxu0
    %v1779 = vadd.f32 %v1497, %v1778
    %v1780 = vpop.f32.mrb[0].mxu0
    %v1781 = vadd.f32 %v1501, %v1780
    %v1782 = vpop.f32.mrb[0].mxu0
    %v1783 = vadd.f32 %v1497, %v1782
    %v1784 = vpop.f32.mrb[0].mxu0
    %v1785 = vadd.f32 %v1501, %v1784
    %1786 = vdwg.mxu0
    %1787 = vmatprep.subr.bf16.mxu0 %v1681
    %1788 = vmatpush1.bf16.msra.mxu0 %v1680
    %1789 = vmatprep.subr.bf16.mxu0 %v1683
    %1790 = vmatpush1.bf16.msra.mxu0 %v1682
    %1791 = vmatprep.subr.bf16.mxu0 %v1685
    %1792 = vmatpush1.bf16.msra.mxu0 %v1684
    %1793 = vmatprep.subr.bf16.mxu0 %v1687
    %1794 = vmatpush1.bf16.msra.mxu0 %v1686
    %1795 = vmatprep.subr.bf16.mxu0 %v1689
    %1796 = vmatpush1.bf16.msra.mxu0 %v1688
    %1797 = vmatprep.subr.bf16.mxu0 %v1691
    %1798 = vmatpush1.bf16.msra.mxu0 %v1690
    %1799 = vmatprep.subr.bf16.mxu0 %v1693
    %1800 = vmatpush1.bf16.msra.mxu0 %v1692
    %1801 = vmatprep.subr.bf16.mxu0 %v1695
    %1802 = vmatpush1.bf16.msra.mxu0 %v1694
    %1803 = vmatprep.subr.bf16.mxu0 0
    %1804 = vmatpush1.bf16.msra.mxu0 0
    %1805 = vmatprep.subr.bf16.mxu0 0
    %1806 = vmatpush1.bf16.msra.mxu0 0
    %1807 = vmatprep.subr.bf16.mxu0 0
    %1808 = vmatpush1.bf16.msra.mxu0 0
    %1809 = vmatprep.subr.bf16.mxu0 0
    %1810 = vmatpush1.bf16.msra.mxu0 0
    %1811 = vmatprep.subr.bf16.mxu0 0
    %1812 = vmatpush1.bf16.msra.mxu0 0
    %1813 = vmatprep.subr.bf16.mxu0 0
    %1814 = vmatpush1.bf16.msra.mxu0 0
    %1815 = vmatprep.subr.bf16.mxu0 0
    %1816 = vmatpush1.bf16.msra.mxu0 0
    %1817 = vmatprep.subr.bf16.mxu0 0
    %1818 = vmatpush1.bf16.msra.mxu0 0
    %1819 = vmatprep.mubr.bf16.mxu0 0
    %1820 = vmatmul.mubr.bf16.gmra.mrb[0].mxu0 %v1443
    %v1821 = vpop.f32.mrb[0].mxu0
    %v1822 = vadd.f32 %v1779, %v1821
    %v1823 = vpop.f32.mrb[0].mxu0
    %v1824 = vadd.f32 %v1781, %v1823
    %v1825 = vpop.f32.mrb[0].mxu0
    %v1826 = vadd.f32 %v1783, %v1825
    %v1827 = vpop.f32.mrb[0].mxu0
    %v1828 = vadd.f32 %v1785, %v1827
    %1829 = vdwg.mxu0
    %v1830 = vmax.f32 %v1822, 0.0
    %v1831 = vmax.f32 %v1824, 0.0
    %v1832 = vmax.f32 %v1826, 0.0
    %v1833 = vmax.f32 %v1828, 0.0
    %v1834 = vpack.c.bf16 %v1832, %v1830
    %v1835 = vpack.c.bf16 %v1833, %v1831
    %v1836 = vld [vmem:[%s5] sm:$0xf]
    %v1837 = vld [vmem:[%s5 + $0x4] sm:$0xf]
    %v1838 = vld [vmem:[%s5 + $0x8] sm:$0xf]
    %v1839 = vld [vmem:[%s5 + $0xc] sm:$0xf]
    %v1840 = vld [vmem:[%s5 + $0x10] sm:$0xf]
    %v1841 = vld [vmem:[%s5 + $0x14] sm:$0xf]
    %v1842 = vld [vmem:[%s5 + $0x18] sm:$0xf]
    %v1843 = vld [vmem:[%s5 + $0x1c] sm:$0xf]
    %v1844 = vld [vmem:[%s5 + $0x20] sm:$0xf]
    %v1845 = vld [vmem:[%s5 + $0x24] sm:$0xf]
    %v1846 = vld [vmem:[%s5 + $0x28] sm:$0xf]
    %v1847 = vld [vmem:[%s5 + $0x2c] sm:$0xf]
    %v1848 = vld [vmem:[%s5 + $0x30] sm:$0xf]
    %v1849 = vld [vmem:[%s5 + $0x34] sm:$0xf]
    %v1850 = vld [vmem:[%s5 + $0x38] sm:$0xf]
    %v1851 = vld [vmem:[%s5 + $0x3c] sm:$0xf]
    %v1852 = vld [vmem:[%s5 + $0x40] sm:$0xf]
    %v1853 = vld [vmem:[%s5 + $0x44] sm:$0xf]
    %v1854 = vld [vmem:[%s5 + $0x48] sm:$0xf]
    %v1855 = vld [vmem:[%s5 + $0x4c] sm:$0xf]
    %v1856 = vld [vmem:[%s5 + $0x50] sm:$0xf]
    %v1857 = vld [vmem:[%s5 + $0x54] sm:$0xf]
    %v1858 = vld [vmem:[%s5 + $0x58] sm:$0xf]
    %v1859 = vld [vmem:[%s5 + $0x5c] sm:$0xf]
    %v1860 = vld [vmem:[%s5 + $0x60] sm:$0xf]
    %v1861 = vld [vmem:[%s5 + $0x64] sm:$0xf]
    %v1862 = vld [vmem:[%s5 + $0x68] sm:$0xf]
    %v1863 = vld [vmem:[%s5 + $0x6c] sm:$0xf]
    %v1864 = vld [vmem:[%s5 + $0x70] sm:$0xf]
    %v1865 = vld [vmem:[%s5 + $0x74] sm:$0xf]
    %v1866 = vld [vmem:[%s5 + $0x78] sm:$0xf]
    %v1867 = vld [vmem:[%s5 + $0x7c] sm:$0xf]
    %v1868 = vld [vmem:[%s6] sm:$0x1]
    %v1870 = vlaneseq
    %v1871 = vshrl.u32 %v1870, 7
    %v1872 = vsub.s32 0, %v1871
    %v1873 = vrot.slane %v1868, %v1872
    %v1907 = vunpack.c.l.b16 %v1836
    %v1908 = vunpack.c.l.b16 %v1837
    %v1909 = vunpack.c.l.b16 %v1838
    %v1910 = vunpack.c.l.b16 %v1839
    %v1911 = vunpack.c.l.b16 %v1840
    %v1912 = vunpack.c.l.b16 %v1841
    %v1913 = vunpack.c.l.b16 %v1842
    %v1914 = vunpack.c.l.b16 %v1843
    %v1915 = vunpack.c.l.b16 %v1844
    %v1916 = vunpack.c.l.b16 %v1845
    %v1917 = vunpack.c.l.b16 %v1846
    %v1918 = vunpack.c.l.b16 %v1847
    %v1919 = vunpack.c.l.b16 %v1848
    %v1920 = vunpack.c.l.b16 %v1849
    %v1921 = vunpack.c.l.b16 %v1850
    %v1922 = vunpack.c.l.b16 %v1851
    %v1923 = vunpack.c.l.b16 %v1852
    %v1924 = vunpack.c.l.b16 %v1853
    %v1925 = vunpack.c.l.b16 %v1854
    %v1926 = vunpack.c.l.b16 %v1855
    %v1927 = vunpack.c.l.b16 %v1856
    %v1928 = vunpack.c.l.b16 %v1857
    %v1929 = vunpack.c.l.b16 %v1858
    %v1930 = vunpack.c.l.b16 %v1859
    %v1931 = vunpack.c.l.b16 %v1860
    %v1932 = vunpack.c.l.b16 %v1861
    %v1933 = vunpack.c.l.b16 %v1862
    %v1934 = vunpack.c.l.b16 %v1863
    %v1935 = vunpack.c.l.b16 %v1864
    %v1936 = vunpack.c.l.b16 %v1865
    %v1937 = vunpack.c.l.b16 %v1866
    %v1938 = vunpack.c.l.b16 %v1867
    %v1939 = vpack.c.b16 %v1908, %v1907
    %v1940 = vpack.c.b16 %v1910, %v1909
    %v1941 = vpack.c.b16 %v1912, %v1911
    %v1942 = vpack.c.b16 %v1914, %v1913
    %v1943 = vpack.c.b16 %v1916, %v1915
    %v1944 = vpack.c.b16 %v1918, %v1917
    %v1945 = vpack.c.b16 %v1920, %v1919
    %v1946 = vpack.c.b16 %v1922, %v1921
    %v1947 = vpack.c.b16 %v1924, %v1923
    %v1948 = vpack.c.b16 %v1926, %v1925
    %v1949 = vpack.c.b16 %v1928, %v1927
    %v1950 = vpack.c.b16 %v1930, %v1929
    %v1951 = vpack.c.b16 %v1932, %v1931
    %v1952 = vpack.c.b16 %v1934, %v1933
    %v1953 = vpack.c.b16 %v1936, %v1935
    %v1954 = vpack.c.b16 %v1938, %v1937
    %1971 = vmatprep.subr.bf16.mxu0 0
    %1972 = vmatpush1.bf16.msra.mxu0 %v1939
    %1973 = vmatprep.subr.bf16.mxu0 0
    %1974 = vmatpush1.bf16.msra.mxu0 %v1940
    %1975 = vmatprep.subr.bf16.mxu0 0
    %1976 = vmatpush1.bf16.msra.mxu0 %v1941
    %1977 = vmatprep.subr.bf16.mxu0 0
    %1978 = vmatpush1.bf16.msra.mxu0 %v1942
    %1979 = vmatprep.subr.bf16.mxu0 0
    %1980 = vmatpush1.bf16.msra.mxu0 %v1943
    %1981 = vmatprep.subr.bf16.mxu0 0
    %1982 = vmatpush1.bf16.msra.mxu0 %v1944
    %1983 = vmatprep.subr.bf16.mxu0 0
    %1984 = vmatpush1.bf16.msra.mxu0 %v1945
    %1985 = vmatprep.subr.bf16.mxu0 0
    %1986 = vmatpush1.bf16.msra.mxu0 %v1946
    %1987 = vmatprep.subr.bf16.mxu0 0
    %1988 = vmatpush1.bf16.msra.mxu0 %v1947
    %1989 = vmatprep.subr.bf16.mxu0 0
    %1990 = vmatpush1.bf16.msra.mxu0 %v1948
    %1991 = vmatprep.subr.bf16.mxu0 0
    %1992 = vmatpush1.bf16.msra.mxu0 %v1949
    %1993 = vmatprep.subr.bf16.mxu0 0
    %1994 = vmatpush1.bf16.msra.mxu0 %v1950
    %1995 = vmatprep.subr.bf16.mxu0 0
    %1996 = vmatpush1.bf16.msra.mxu0 %v1951
    %1997 = vmatprep.subr.bf16.mxu0 0
    %1998 = vmatpush1.bf16.msra.mxu0 %v1952
    %1999 = vmatprep.subr.bf16.mxu0 0
    %2000 = vmatpush1.bf16.msra.mxu0 %v1953
    %2001 = vmatprep.subr.bf16.mxu0 0
    %2002 = vmatpush1.bf16.msra.mxu0 %v1954
    %2003 = vmatprep.mubr.bf16.mxu0 %v1835
    %2004 = vmatmul.mubr.bf16.gmra.mrb[0].mxu0 %v1834
    %v2005 = vpop.f32.mrb[0].mxu0
    %v2006 = vadd.f32 %v1873, %v2005
    %v2007 = vpop.f32.mrb[0].mxu0
    %v2008 = vpop.f32.mrb[0].mxu0
    %v2009 = vadd.f32 %v1873, %v2008
    %v2010 = vpop.f32.mrb[0].mxu0
    %2011 = vdwg.mxu0
    %2012 = vst [vmem:[%s7] sm:$0xff] %v2006
    %2013 = vst [vmem:[%s7 + $0x8] sm:$0xff] %v2009
    // Predicated region
    $region38: #{neural_network_forward.1} parent=1 // pred_check
      _
    $region39: #{neural_network_forward.1} parent=1 // pred_check_branch
      %2015 = sbr.rel (0) target = $region41
    $region40: #{neural_network_forward.1} parent=1 // pred_region
      _
    $region41: #{neural_network_forward.1} parent=1 // pred_fallthru
      _
    // Predicated region
    $region42: #{neural_network_forward.1} parent=1 // pred_check
      _
    $region43: #{neural_network_forward.1} parent=1 // pred_check_branch
      %2017 = sbr.rel (0) target = $region45
    $region44: #{neural_network_forward.1} parent=1 // pred_region
      _
    $region45: #{neural_network_forward.1} parent=1 // pred_fallthru
      _
    %2018 = vsyncpa [#allocation3], 1
    %2019 = vsyncpa [#allocation5], 1

</llo_original>
